<compile_context>
chip_gen: v7x
topology: tpu7x:2x2x1
jax: 0.10.0
libtpu: 0.0.40
codegen_flags: <defaults>
</compile_context>

<pallas_src>
import jax
import jax.numpy as jnp
from jax.experimental import pallas as pl
from jax.experimental.pallas import tpu as pltpu

# ---- problem constants (from the module) ----
C = 440            # channels
G = 55             # conv groups
CPG = C // G       # channels per group (8)
H = W = 7          # spatial size
HW = H * W         # 49
KH = KW = 3        # conv kernel
NT = KH * KW       # 9 taps
EPS = 1e-5

# ---- padded / tiled layout constants ----
CPAD = 512         # channels padded to full lane tiles (2x256 MXU tiles)
NB = 2             # channel halves (group-aligned since CPG divides 256)
CB = CPAD // NB    # 256 channels per half
PAD = W + 1        # 8 zero rows before the data (largest |flattened shift| = 8)
PAD_ROWS = 72      # >= PAD + HW + 8 (= 65), rounded up to a sublane multiple


def bn_relu_gconv_kernel(x_ref, w_ref, gamma_ref, beta_ref, o_ref,
                         ypad_ref, patches_ref):
    # x_ref        : (HW, CB)          activations of this 256-channel half
    # w_ref        : (1, 1, CB, CB)    dense weight of this half / this tap
    # gamma_ref    : (1, CB), beta_ref : (1, CB)
    # o_ref        : (HW, CB)          resident f32 output block (accumulator)
    # ypad_ref     : (PAD_ROWS, CB)    zero-padded flattened activations
    # patches_ref  : (NT, HW, CB)      pre-shifted, pre-masked tap patches
    t = pl.program_id(1)

    @pl.when(t == 0)
    def _():
        x = x_ref[...]                                              # (HW, CB)

        # ---- BatchNorm2d (training mode: batch stats over N*H*W, biased var) ----
        inv_n = 1.0 / HW
        mean = jnp.sum(x, axis=0, keepdims=True) * inv_n            # (1, CB)
        diff = x - mean
        var = jnp.sum(diff * diff, axis=0, keepdims=True) * inv_n   # (1, CB)
        scale = gamma_ref[...] * jax.lax.rsqrt(var + EPS)
        y = jnp.maximum(diff * scale + beta_ref[...], 0.0)          # ReLU

        # ---- zero-padded flattened activations (only pad rows zeroed) ----
        ypad_ref[pl.ds(0, PAD), :] = jnp.zeros((PAD, CB), jnp.float32)
        ypad_ref[pl.ds(PAD_ROWS - 16, 16), :] = jnp.zeros((16, CB), jnp.float32)
        ypad_ref[pl.ds(PAD, HW), :] = y                             # rows [8, 57)

        # ---- destination-column validity masks for the horizontal halo ----
        pcol = jax.lax.broadcasted_iota(jnp.int32, (HW, 1), 0) % W
        mask_l = (pcol >= 1).astype(jnp.float32)        # valid dests for dx = -1
        mask_r = (pcol <= W - 2).astype(jnp.float32)    # valid dests for dx = +1

        # ---- pre-build the nine shifted+masked tap patches (static slices) ----
        for k in range(NT):
            dy, dx = k // KW - 1, k % KW - 1
            s = dy * W + dx                                         # flattened shift
            patch = ypad_ref[pl.ds(PAD + s, HW), :]                 # (HW, CB)
            if dx == -1:
                patch = patch * mask_l
            elif dx == 1:
                patch = patch * mask_r
            patches_ref[k] = patch

        o_ref[...] = jnp.zeros_like(o_ref)

    # ---- one MXU matmul per tap, weight DMA pipelined by the grid ----
    o_ref[...] += jnp.dot(patches_ref[t], w_ref[0, 0],
                          preferred_element_type=jnp.float32)


def module_forward(x_nchw, gamma, beta, conv_w):
    """x_nchw: (1, C, H, W) f32; gamma, beta: (C,); conv_w: (C, CPG, KH, KW) (OIHW)."""
    # Channels-last flattened spatial, padded to 512 lanes.
    x_flat = jnp.transpose(x_nchw[0], (1, 2, 0)).reshape(HW, C).astype(jnp.float32)
    x_flat = jnp.pad(x_flat, ((0, 0), (0, CPAD - C)))               # (49, 512)

    gamma_p = jnp.pad(gamma.astype(jnp.float32), (0, CPAD - C)).reshape(1, CPAD)
    beta_p = jnp.pad(beta.astype(jnp.float32), (0, CPAD - C)).reshape(1, CPAD)

    # Dense per-tap, per-half block-diagonal weights, built once in the wrapper:
    #   w_blocks[h, t, ci, co] = conv_w[h*CB+co, ci % CPG, ky, kx]
    #                            if ci//CPG == co//CPG else 0
    wk = jnp.transpose(conv_w.astype(jnp.float32), (2, 3, 1, 0)).reshape(NT, CPG, C)
    wk = jnp.pad(wk, ((0, 0), (0, 0), (0, CPAD - C)))                # (9, 8, 512)
    wk_h = jnp.transpose(wk.reshape(NT, CPG, NB, CB), (2, 0, 1, 3))  # (2, 9, 8, 256)
    cb = jnp.arange(CB)
    gmask = (cb[:, None] // CPG == cb[None, :] // CPG).astype(jnp.float32)  # (256, 256)
    w_blocks = jnp.tile(wk_h, (1, 1, CB // CPG, 1)) * gmask          # (2, 9, 256, 256)

    out_flat = pl.pallas_call(
        bn_relu_gconv_kernel,
        out_shape=jax.ShapeDtypeStruct((HW, CPAD), jnp.float32),
        grid=(NB, NT),
        in_specs=[
            pl.BlockSpec((HW, CB), lambda c, t: (0, c)),
            pl.BlockSpec((1, 1, CB, CB), lambda c, t: (c, t, 0, 0)),
            pl.BlockSpec((1, CB), lambda c, t: (0, c)),
            pl.BlockSpec((1, CB), lambda c, t: (0, c)),
        ],
        out_specs=pl.BlockSpec((HW, CB), lambda c, t: (0, c)),
        scratch_shapes=[
            pltpu.VMEM((PAD_ROWS, CB), jnp.float32),
            pltpu.VMEM((NT, HW, CB), jnp.float32),
        ],
        compiler_params=pltpu.CompilerParams(
            dimension_semantics=("parallel", "arbitrary"),
        ),
    )(x_flat, w_blocks, gamma_p, beta_p)

    out = out_flat[:, :C]                                            # drop channel pad
    return jnp.transpose(out.reshape(H, W, C), (2, 0, 1))[None]      # (1, C, H, W)


if __name__ == "__main__":
    key = jax.random.PRNGKey(0)
    kx, kg, kb, kw = jax.random.split(key, 4)

    # Deterministic synthetic parameters (shapes from the module's __init__).
    x = jax.random.normal(kx, (1, C, H, W), jnp.float32)
    gamma = 1.0 + 0.1 * jax.random.normal(kg, (C,), jnp.float32)   # BN weight
    beta = 0.1 * jax.random.normal(kb, (C,), jnp.float32)          # BN bias
    conv_w = 0.1 * jax.random.normal(kw, (C, CPG, KH, KW), jnp.float32)

    out = jax.block_until_ready(module_forward(x, gamma, beta, conv_w))

    # Pure-JAX reference of the same forward pass (training-mode BatchNorm).
    mean = jnp.mean(x, axis=(0, 2, 3), keepdims=True)
    var = jnp.mean((x - mean) ** 2, axis=(0, 2, 3), keepdims=True)
    xn = (x - mean) / jnp.sqrt(var + EPS)
    xn = xn * gamma.reshape(1, C, 1, 1) + beta.reshape(1, C, 1, 1)
    xr = jnp.maximum(xn, 0.0)
    ref = jax.lax.conv_general_dilated(
        xr, conv_w, window_strides=(1, 1), padding=((1, 1), (1, 1)),
        dimension_numbers=("NCHW", "OIHW", "NCHW"), feature_group_count=G)

    assert out.shape == (1, C, H, W), out.shape
    err = float(jnp.max(jnp.abs(out - ref)))
    assert jnp.allclose(out, ref, atol=2e-3, rtol=2e-3), f"max abs err = {err}"
    print("KERNEL_OK")
</pallas_src>

<mosaic_0001>
module attributes {stable_mosaic.version = 11 : i64} {
  func.func @bn_relu_gconv_kernel(%arg0: i32, %arg1: i32, %arg2: memref<49x256xf32, #tpu.memory_space<vmem>>, %arg3: memref<1x1x256x256xf32, #tpu.memory_space<vmem>>, %arg4: memref<1x256xf32, #tpu.memory_space<vmem>>, %arg5: memref<1x256xf32, #tpu.memory_space<vmem>>, %arg6: memref<49x256xf32, #tpu.memory_space<vmem>>, %arg7: memref<72x256xf32, #tpu.memory_space<vmem>>, %arg8: memref<9x49x256xf32, #tpu.memory_space<vmem>>) attributes {dimension_semantics = [#tpu.dimension_semantics<parallel>, #tpu.dimension_semantics<arbitrary>], iteration_bounds = array<i64: 2, 9>, scalar_prefetch = 0 : i64, scratch_operands = 2 : i64, tpu.core_type = #tpu.core_type<tc>, window_params = [{transform_indices = @transform_0, window_bounds = array<i64: 49, 256>}, {transform_indices = @transform_1, window_bounds = array<i64: 1, 1, 256, 256>}, {transform_indices = @transform_2, window_bounds = array<i64: 1, 256>}, {transform_indices = @transform_3, window_bounds = array<i64: 1, 256>}, {transform_indices = @transform_4, window_bounds = array<i64: 49, 256>}]} {
    %c0_i32 = arith.constant 0 : i32
    %0 = arith.cmpi eq, %arg1, %c0_i32 : i32
    %1 = arith.extui %0 : i1 to i32
    %c0_i32_0 = arith.constant 0 : i32
    %2 = arith.cmpi ne, %1, %c0_i32_0 : i32
    scf.if %2 {
      %c0_10 = arith.constant 0 : index
      %c0_11 = arith.constant 0 : index
      %12 = vector.load %arg2[%c0_10, %c0_11] : memref<49x256xf32, #tpu.memory_space<vmem>>, vector<49x256xf32>
      %cst_12 = arith.constant dense<0.000000e+00> : vector<256xf32>
      %13 = vector.multi_reduction <add>, %12, %cst_12 [0] : vector<49x256xf32> to vector<256xf32>
      %14 = vector.shape_cast %13 : vector<256xf32> to vector<1x256xf32>
      %cst_13 = arith.constant 0.0204081628 : f32
      %15 = vector.broadcast %cst_13 : f32 to vector<1x256xf32>
      %16 = arith.mulf %14, %15 : vector<1x256xf32>
      %17 = vector.broadcast %16 : vector<1x256xf32> to vector<49x256xf32>
      %18 = arith.subf %12, %17 : vector<49x256xf32>
      %19 = arith.mulf %18, %18 : vector<49x256xf32>
      %cst_14 = arith.constant dense<0.000000e+00> : vector<256xf32>
      %20 = vector.multi_reduction <add>, %19, %cst_14 [0] : vector<49x256xf32> to vector<256xf32>
      %21 = vector.shape_cast %20 : vector<256xf32> to vector<1x256xf32>
      %cst_15 = arith.constant 0.0204081628 : f32
      %22 = vector.broadcast %cst_15 : f32 to vector<1x256xf32>
      %23 = arith.mulf %21, %22 : vector<1x256xf32>
      %c0_16 = arith.constant 0 : index
      %c0_17 = arith.constant 0 : index
      %24 = vector.load %arg4[%c0_16, %c0_17] : memref<1x256xf32, #tpu.memory_space<vmem>>, vector<1x256xf32>
      %cst_18 = arith.constant 9.99999974E-6 : f32
      %25 = vector.broadcast %cst_18 : f32 to vector<1x256xf32>
      %26 = arith.addf %23, %25 : vector<1x256xf32>
      %27 = math.rsqrt %26 : vector<1x256xf32>
      %28 = arith.mulf %24, %27 : vector<1x256xf32>
      %29 = vector.broadcast %28 : vector<1x256xf32> to vector<49x256xf32>
      %30 = arith.mulf %18, %29 : vector<49x256xf32>
      %c0_19 = arith.constant 0 : index
      %c0_20 = arith.constant 0 : index
      %31 = vector.load %arg5[%c0_19, %c0_20] : memref<1x256xf32, #tpu.memory_space<vmem>>, vector<1x256xf32>
      %32 = vector.broadcast %31 : vector<1x256xf32> to vector<49x256xf32>
      %33 = arith.addf %30, %32 : vector<49x256xf32>
      %cst_21 = arith.constant 0.000000e+00 : f32
      %34 = vector.broadcast %cst_21 : f32 to vector<49x256xf32>
      %35 = arith.maximumf %33, %34 : vector<49x256xf32>
      %cst_22 = arith.constant 0.000000e+00 : f32
      %36 = vector.broadcast %cst_22 : f32 to vector<8x256xf32>
      %c0_23 = arith.constant 0 : index
      %c0_24 = arith.constant 0 : index
      %37 = vector.load %arg7[%c0_23, %c0_24] : memref<72x256xf32, #tpu.memory_space<vmem>>, vector<8x256xf32>
      tpu.vector_store %arg7[%c0_23, %c0_24], %36 {strides = array<i32>} : memref<72x256xf32, #tpu.memory_space<vmem>>, vector<8x256xf32>,
      %cst_25 = arith.constant 0.000000e+00 : f32
      %38 = vector.broadcast %cst_25 : f32 to vector<16x256xf32>
      %c56 = arith.constant 56 : index
      %c0_26 = arith.constant 0 : index
      %39 = vector.load %arg7[%c56, %c0_26] : memref<72x256xf32, #tpu.memory_space<vmem>>, vector<16x256xf32>
      tpu.vector_store %arg7[%c56, %c0_26], %38 {strides = array<i32>} : memref<72x256xf32, #tpu.memory_space<vmem>>, vector<16x256xf32>,
      %c8 = arith.constant 8 : index
      %c0_27 = arith.constant 0 : index
      %40 = vector.load %arg7[%c8, %c0_27] : memref<72x256xf32, #tpu.memory_space<vmem>>, vector<49x256xf32>
      tpu.vector_store %arg7[%c8, %c0_27], %35 {strides = array<i32>} : memref<72x256xf32, #tpu.memory_space<vmem>>, vector<49x256xf32>,
      %41 = tpu.iota {dimensions = array<i32: 0>} : vector<49x1xi32>
      %c7_i32 = arith.constant 7 : i32
      %c0_i32_28 = arith.constant 0 : i32
      %42 = arith.cmpi eq, %c7_i32, %c0_i32_28 : i32
      %c1_i32 = arith.constant 1 : i32
      %43 = arith.select %42, %c1_i32, %c7_i32 : i32
      %44 = vector.broadcast %43 : i32 to vector<49x1xi32>
      %45 = arith.remsi %41, %44 : vector<49x1xi32>
      %c0_i32_29 = arith.constant 0 : i32
      %46 = vector.broadcast %c0_i32_29 : i32 to vector<49x1xi32>
      %47 = arith.cmpi ne, %45, %46 : vector<49x1xi32>
      %c0_i32_30 = arith.constant 0 : i32
      %48 = vector.broadcast %c0_i32_30 : i32 to vector<49x1xi32>
      %49 = arith.cmpi slt, %45, %48 : vector<49x1xi32>
      %c0_i32_31 = arith.constant 0 : i32
      %50 = arith.cmpi slt, %43, %c0_i32_31 : i32
      %51 = vector.broadcast %50 : i1 to vector<49x1xi1>
      %52 = vector.broadcast %51 : vector<49x1xi1> to vector<49x1xi1>
      %53 = arith.xori %49, %52 : vector<49x1xi1>
      %54 = arith.andi %53, %47 : vector<49x1xi1>
      %55 = vector.broadcast %43 : i32 to vector<49x1xi32>
      %56 = arith.addi %45, %55 : vector<49x1xi32>
      %57 = arith.select %54, %56, %45 : vector<49x1xi1>, vector<49x1xi32>
      %c1_i32_32 = arith.constant 1 : i32
      %58 = vector.broadcast %c1_i32_32 : i32 to vector<49x1xi32>
      %59 = arith.cmpi sge, %57, %58 : vector<49x1xi32>
      %60 = arith.extui %59 : vector<49x1xi1> to vector<49x1xi32>
      %61 = arith.sitofp %60 : vector<49x1xi32> to vector<49x1xf32>
      %c5_i32 = arith.constant 5 : i32
      %62 = vector.broadcast %c5_i32 : i32 to vector<49x1xi32>
      %63 = arith.cmpi sle, %57, %62 : vector<49x1xi32>
      %64 = arith.extui %63 : vector<49x1xi1> to vector<49x1xi32>
      %65 = arith.sitofp %64 : vector<49x1xi32> to vector<49x1xf32>
      %c0_33 = arith.constant 0 : index
      %c0_34 = arith.constant 0 : index
      %66 = vector.load %arg7[%c0_33, %c0_34] : memref<72x256xf32, #tpu.memory_space<vmem>>, vector<49x256xf32>
      %67 = vector.broadcast %61 : vector<49x1xf32> to vector<49x256xf32>
      %68 = arith.mulf %66, %67 : vector<49x256xf32>
      %c0_35 = arith.constant 0 : index
      %c0_36 = arith.constant 0 : index
      %c0_37 = arith.constant 0 : index
      %69 = vector.load %arg8[%c0_35, %c0_36, %c0_37] : memref<9x49x256xf32, #tpu.memory_space<vmem>>, vector<1x49x256xf32>
      %70 = vector.shape_cast %69 : vector<1x49x256xf32> to vector<49x256xf32>
      %71 = vector.shape_cast %68 : vector<49x256xf32> to vector<1x49x256xf32>
      tpu.vector_store %arg8[%c0_35, %c0_36, %c0_37], %71 {strides = array<i32>} : memref<9x49x256xf32, #tpu.memory_space<vmem>>, vector<1x49x256xf32>,
      %c1 = arith.constant 1 : index
      %c0_38 = arith.constant 0 : index
      %72 = vector.load %arg7[%c1, %c0_38] : memref<72x256xf32, #tpu.memory_space<vmem>>, vector<49x256xf32>
      %c1_39 = arith.constant 1 : index
      %c0_40 = arith.constant 0 : index
      %c0_41 = arith.constant 0 : index
      %73 = vector.load %arg8[%c1_39, %c0_40, %c0_41] : memref<9x49x256xf32, #tpu.memory_space<vmem>>, vector<1x49x256xf32>
      %74 = vector.shape_cast %73 : vector<1x49x256xf32> to vector<49x256xf32>
      %75 = vector.shape_cast %72 : vector<49x256xf32> to vector<1x49x256xf32>
      tpu.vector_store %arg8[%c1_39, %c0_40, %c0_41], %75 {strides = array<i32>} : memref<9x49x256xf32, #tpu.memory_space<vmem>>, vector<1x49x256xf32>,
      %c2 = arith.constant 2 : index
      %c0_42 = arith.constant 0 : index
      %76 = vector.load %arg7[%c2, %c0_42] : memref<72x256xf32, #tpu.memory_space<vmem>>, vector<49x256xf32>
      %77 = vector.broadcast %65 : vector<49x1xf32> to vector<49x256xf32>
      %78 = arith.mulf %76, %77 : vector<49x256xf32>
      %c2_43 = arith.constant 2 : index
      %c0_44 = arith.constant 0 : index
      %c0_45 = arith.constant 0 : index
      %79 = vector.load %arg8[%c2_43, %c0_44, %c0_45] : memref<9x49x256xf32, #tpu.memory_space<vmem>>, vector<1x49x256xf32>
      %80 = vector.shape_cast %79 : vector<1x49x256xf32> to vector<49x256xf32>
      %81 = vector.shape_cast %78 : vector<49x256xf32> to vector<1x49x256xf32>
      tpu.vector_store %arg8[%c2_43, %c0_44, %c0_45], %81 {strides = array<i32>} : memref<9x49x256xf32, #tpu.memory_space<vmem>>, vector<1x49x256xf32>,
      %c7 = arith.constant 7 : index
      %c0_46 = arith.constant 0 : index
      %82 = vector.load %arg7[%c7, %c0_46] : memref<72x256xf32, #tpu.memory_space<vmem>>, vector<49x256xf32>
      %83 = vector.broadcast %61 : vector<49x1xf32> to vector<49x256xf32>
      %84 = arith.mulf %82, %83 : vector<49x256xf32>
      %c3 = arith.constant 3 : index
      %c0_47 = arith.constant 0 : index
      %c0_48 = arith.constant 0 : index
      %85 = vector.load %arg8[%c3, %c0_47, %c0_48] : memref<9x49x256xf32, #tpu.memory_space<vmem>>, vector<1x49x256xf32>
      %86 = vector.shape_cast %85 : vector<1x49x256xf32> to vector<49x256xf32>
      %87 = vector.shape_cast %84 : vector<49x256xf32> to vector<1x49x256xf32>
      tpu.vector_store %arg8[%c3, %c0_47, %c0_48], %87 {strides = array<i32>} : memref<9x49x256xf32, #tpu.memory_space<vmem>>, vector<1x49x256xf32>,
      %c8_49 = arith.constant 8 : index
      %c0_50 = arith.constant 0 : index
      %88 = vector.load %arg7[%c8_49, %c0_50] : memref<72x256xf32, #tpu.memory_space<vmem>>, vector<49x256xf32>
      %c4 = arith.constant 4 : index
      %c0_51 = arith.constant 0 : index
      %c0_52 = arith.constant 0 : index
      %89 = vector.load %arg8[%c4, %c0_51, %c0_52] : memref<9x49x256xf32, #tpu.memory_space<vmem>>, vector<1x49x256xf32>
      %90 = vector.shape_cast %89 : vector<1x49x256xf32> to vector<49x256xf32>
      %91 = vector.shape_cast %88 : vector<49x256xf32> to vector<1x49x256xf32>
      tpu.vector_store %arg8[%c4, %c0_51, %c0_52], %91 {strides = array<i32>} : memref<9x49x256xf32, #tpu.memory_space<vmem>>, vector<1x49x256xf32>,
      %c9 = arith.constant 9 : index
      %c0_53 = arith.constant 0 : index
      %92 = vector.load %arg7[%c9, %c0_53] : memref<72x256xf32, #tpu.memory_space<vmem>>, vector<49x256xf32>
      %93 = vector.broadcast %65 : vector<49x1xf32> to vector<49x256xf32>
      %94 = arith.mulf %92, %93 : vector<49x256xf32>
      %c5 = arith.constant 5 : index
      %c0_54 = arith.constant 0 : index
      %c0_55 = arith.constant 0 : index
      %95 = vector.load %arg8[%c5, %c0_54, %c0_55] : memref<9x49x256xf32, #tpu.memory_space<vmem>>, vector<1x49x256xf32>
      %96 = vector.shape_cast %95 : vector<1x49x256xf32> to vector<49x256xf32>
      %97 = vector.shape_cast %94 : vector<49x256xf32> to vector<1x49x256xf32>
      tpu.vector_store %arg8[%c5, %c0_54, %c0_55], %97 {strides = array<i32>} : memref<9x49x256xf32, #tpu.memory_space<vmem>>, vector<1x49x256xf32>,
      %c14 = arith.constant 14 : index
      %c0_56 = arith.constant 0 : index
      %98 = vector.load %arg7[%c14, %c0_56] : memref<72x256xf32, #tpu.memory_space<vmem>>, vector<49x256xf32>
      %99 = vector.broadcast %61 : vector<49x1xf32> to vector<49x256xf32>
      %100 = arith.mulf %98, %99 : vector<49x256xf32>
      %c6 = arith.constant 6 : index
      %c0_57 = arith.constant 0 : index
      %c0_58 = arith.constant 0 : index
      %101 = vector.load %arg8[%c6, %c0_57, %c0_58] : memref<9x49x256xf32, #tpu.memory_space<vmem>>, vector<1x49x256xf32>
      %102 = vector.shape_cast %101 : vector<1x49x256xf32> to vector<49x256xf32>
      %103 = vector.shape_cast %100 : vector<49x256xf32> to vector<1x49x256xf32>
      tpu.vector_store %arg8[%c6, %c0_57, %c0_58], %103 {strides = array<i32>} : memref<9x49x256xf32, #tpu.memory_space<vmem>>, vector<1x49x256xf32>,
      %c15 = arith.constant 15 : index
      %c0_59 = arith.constant 0 : index
      %104 = vector.load %arg7[%c15, %c0_59] : memref<72x256xf32, #tpu.memory_space<vmem>>, vector<49x256xf32>
      %c7_60 = arith.constant 7 : index
      %c0_61 = arith.constant 0 : index
      %c0_62 = arith.constant 0 : index
      %105 = vector.load %arg8[%c7_60, %c0_61, %c0_62] : memref<9x49x256xf32, #tpu.memory_space<vmem>>, vector<1x49x256xf32>
      %106 = vector.shape_cast %105 : vector<1x49x256xf32> to vector<49x256xf32>
      %107 = vector.shape_cast %104 : vector<49x256xf32> to vector<1x49x256xf32>
      tpu.vector_store %arg8[%c7_60, %c0_61, %c0_62], %107 {strides = array<i32>} : memref<9x49x256xf32, #tpu.memory_space<vmem>>, vector<1x49x256xf32>,
      %c16 = arith.constant 16 : index
      %c0_63 = arith.constant 0 : index
      %108 = vector.load %arg7[%c16, %c0_63] : memref<72x256xf32, #tpu.memory_space<vmem>>, vector<49x256xf32>
      %109 = vector.broadcast %65 : vector<49x1xf32> to vector<49x256xf32>
      %110 = arith.mulf %108, %109 : vector<49x256xf32>
      %c8_64 = arith.constant 8 : index
      %c0_65 = arith.constant 0 : index
      %c0_66 = arith.constant 0 : index
      %111 = vector.load %arg8[%c8_64, %c0_65, %c0_66] : memref<9x49x256xf32, #tpu.memory_space<vmem>>, vector<1x49x256xf32>
      %112 = vector.shape_cast %111 : vector<1x49x256xf32> to vector<49x256xf32>
      %113 = vector.shape_cast %110 : vector<49x256xf32> to vector<1x49x256xf32>
      tpu.vector_store %arg8[%c8_64, %c0_65, %c0_66], %113 {strides = array<i32>} : memref<9x49x256xf32, #tpu.memory_space<vmem>>, vector<1x49x256xf32>,
      %cst_67 = arith.constant 0.000000e+00 : f32
      %114 = vector.broadcast %cst_67 : f32 to vector<49x256xf32>
      %c0_68 = arith.constant 0 : index
      %c0_69 = arith.constant 0 : index
      %115 = vector.load %arg6[%c0_68, %c0_69] : memref<49x256xf32, #tpu.memory_space<vmem>>, vector<49x256xf32>
      tpu.vector_store %arg6[%c0_68, %c0_69], %114 {strides = array<i32>} : memref<49x256xf32, #tpu.memory_space<vmem>>, vector<49x256xf32>,
    } else {
    }
    %c0 = arith.constant 0 : index
    %c0_1 = arith.constant 0 : index
    %3 = vector.load %arg6[%c0, %c0_1] : memref<49x256xf32, #tpu.memory_space<vmem>>, vector<49x256xf32>
    %4 = arith.index_cast %arg1 : i32 to index
    %c0_2 = arith.constant 0 : index
    %c0_3 = arith.constant 0 : index
    %5 = vector.load %arg8[%4, %c0_2, %c0_3] : memref<9x49x256xf32, #tpu.memory_space<vmem>>, vector<1x49x256xf32>
    %6 = vector.shape_cast %5 : vector<1x49x256xf32> to vector<49x256xf32>
    %c0_4 = arith.constant 0 : index
    %c0_5 = arith.constant 0 : index
    %c0_6 = arith.constant 0 : index
    %c0_7 = arith.constant 0 : index
    %7 = vector.load %arg3[%c0_4, %c0_5, %c0_6, %c0_7] : memref<1x1x256x256xf32, #tpu.memory_space<vmem>>, vector<1x1x256x256xf32>
    %8 = vector.shape_cast %7 : vector<1x1x256x256xf32> to vector<256x256xf32>
    %cst = arith.constant dense<0.000000e+00> : vector<49x256xf32>
    %9 = tpu.matmul %6, %8, %cst {dimension_numbers = #tpu.dot_dimension_numbers<[1], [0], [0], [1], [0, 0, 1, 1], [], []>} : vector<49x256xf32>, vector<256x256xf32>, vector<49x256xf32> -> vector<49x256xf32>
    %10 = arith.addf %3, %9 : vector<49x256xf32>
    %c0_8 = arith.constant 0 : index
    %c0_9 = arith.constant 0 : index
    %11 = vector.load %arg6[%c0_8, %c0_9] : memref<49x256xf32, #tpu.memory_space<vmem>>, vector<49x256xf32>
    tpu.vector_store %arg6[%c0_8, %c0_9], %10 {strides = array<i32>} : memref<49x256xf32, #tpu.memory_space<vmem>>, vector<49x256xf32>,
    return
  }
  func.func @transform_0(%arg0: i32, %arg1: i32) -> (i32, i32) {
    %c0_i32 = arith.constant 0 : i32
    %c0_i32_0 = arith.constant 0 : i32
    return %c0_i32, %arg0 : i32, i32
  }
  func.func @transform_1(%arg0: i32, %arg1: i32) -> (i32, i32, i32, i32) {
    %c0_i32 = arith.constant 0 : i32
    %c0_i32_0 = arith.constant 0 : i32
    %c0_i32_1 = arith.constant 0 : i32
    return %arg0, %arg1, %c0_i32, %c0_i32_0 : i32, i32, i32, i32
  }
  func.func @transform_2(%arg0: i32, %arg1: i32) -> (i32, i32) {
    %c0_i32 = arith.constant 0 : i32
    %c0_i32_0 = arith.constant 0 : i32
    return %c0_i32, %arg0 : i32, i32
  }
  func.func @transform_3(%arg0: i32, %arg1: i32) -> (i32, i32) {
    %c0_i32 = arith.constant 0 : i32
    %c0_i32_0 = arith.constant 0 : i32
    return %c0_i32, %arg0 : i32, i32
  }
  func.func @transform_4(%arg0: i32, %arg1: i32) -> (i32, i32) {
    %c0_i32 = arith.constant 0 : i32
    %c0_i32_0 = arith.constant 0 : i32
    return %c0_i32, %arg0 : i32, i32
  }
}

</mosaic_0001>

<llo_original>
// kernel: tpu_custom_call.1
$region0: #{tpu_custom_call.1}
  #allocation0 [shape = 'u32[]', space=smem, size = 0x4, offset = 0x4, fixed_abs, tag = 'smem constant byte address 0x4 - core index']
  #allocation1 [shape = 'u32[144,128]{1,0:T(1,128)}', space=vmem, size = 0x12000, scoped, tag = 'internal scratch']
  #allocation2 [shape = 'f32[72,256]{1,0:T(8,128)}', space=vmem, size = 0x12000, scoped, tag = 'scratch operand']
  #allocation3 [shape = 'f32[9,49,256]{2,1,0:T(8,128)}', space=vmem, size = 0x7e000, scoped, tag = 'scratch operand']
  %s0 = inlined_call_operand.hbm [shape: f32[49,512], index: 0, kind: input, shape index: {}]
  %s1 = inlined_call_operand.hbm [shape: f32[2,9,256,256], index: 1, kind: input, shape index: {}]
  %s2 = inlined_call_operand.hbm [shape: f32[1,512], index: 2, kind: input, shape index: {}]
  %s3 = inlined_call_operand.hbm [shape: f32[1,512], index: 3, kind: input, shape index: {}]
  %s4 = inlined_call_operand.hbm [shape: f32[49,512], index: 4, kind: output, shape index: {}]
  %s5 = sld [smem:[#allocation0]]
  $region69: #{tpu_custom_call.1} parent=0
    _
  %s7 = ssub.s32 1, %s5
  %s8 = scalar_select 0, %s7, %s5
  $region1: #{tpu_custom_call.1} parent=0
    #allocation4 [shape = 'u8[114688]{0}', space=vmem, size = 0x1c000, scoped, tag = 'input window, operand 0']
    #allocation5 [shape = 's32[2]{0}', space=sflag, size = 0x8, scoped, tag = 'scoped memory for tpu_custom_call.1']
    #allocation6 [shape = 's32[2]{0}', space=sflag, size = 0x8, scoped, tag = 'scoped memory for tpu_custom_call.1']
    #allocation7 [shape = 'u8[524288]{0}', space=vmem, size = 0x80000, scoped, tag = 'input window, operand 1']
    #allocation8 [shape = 's32[2]{0}', space=sflag, size = 0x8, scoped, tag = 'scoped memory for tpu_custom_call.1']
    #allocation9 [shape = 'u8[2048]{0}', space=vmem, size = 0x800, scoped, tag = 'input window, operand 2']
    #allocation10 [shape = 'u8[2048]{0}', space=vmem, size = 0x800, scoped, tag = 'input window, operand 3']
    #allocation11 [shape = 's32[2]{0}', space=sflag, size = 0x8, scoped, tag = 'scoped memory for tpu_custom_call.1']
    #allocation12 [shape = 'u8[114688]{0}', space=vmem, size = 0x1c000, scoped, tag = 'output window, operand 0']
    %9 = vsyncpa [#allocation5], 0
    %s10 = scalar_lea.sflag [#allocation5], 1
    %11 = vsyncpa %s10, 0
    %12 = vsyncpa [#allocation8], 0
    %s13 = scalar_lea.sflag [#allocation8], 1
    %14 = vsyncpa %s13, 0
    %15 = vsyncpa [#allocation11], 0
    %s16 = scalar_lea.sflag [#allocation11], 1
    %17 = vsyncpa %s16, 0
    %18 = vsyncpa [#allocation6], 0
    %s19 = scalar_lea.sflag [#allocation6], 1
    %20 = vsyncpa %s19, 0
    loop: start=0, step=1, limit=20
    $region2: #{tpu_custom_call.1} parent=1 // loop_pre_header
      _
    $region3: #{tpu_custom_call.1} parent=1 // loop_header
      %s22 = sphi 0, %s26
      %p23 = scmp.ge.s32.totalorder %s22, 20
      %s29 = sphi 0, %s41
      %s30 = sphi 0, %s37
      %s31 = sphi 0, %s29
      %s32 = sphi 0, %s30
      %s33 = sphi 0, %s31
      %s34 = sphi 0, %s32
      %s44 = sphi 0, %s46
      %s47 = sphi 0, %s44
      %s48 = sphi 0, %s47
      %s64 = sphi 0, %s48
      %s72 = sphi 0, %s74
      %s75 = sphi 0, %s72
      %s76 = sphi 0, %s75
      %s92 = sphi 0, %s76
      %s98 = sphi 0, %s100
      %s101 = sphi 0, %s98
      %s102 = sphi 0, %s101
      %s118 = sphi 0, %s102
      %s124 = sphi 0, %s126
      %s127 = sphi 0, %s124
      %s128 = sphi 0, %s127
      %s144 = sphi 0, %s128
      %s150 = sphi 0, %s152
      %s153 = sphi 0, %s150
      %s154 = sphi 0, %s153
      %s170 = sphi 0, %s154
    $region4: #{tpu_custom_call.1} parent=1 // loop_header_branch
      %25 = sbr.rel (%p23) target = $region8
    $region5: #{tpu_custom_call.1} parent=1 // loop_body
      %s27 = ssub.s32 %s22, 1
      %s28 = ssub.s32 %s22, 2
      %s35 = sadd.s32 1, %s30
      %p36 = scmp.ge.s32.totalorder %s35, 9
      %s37 = scalar_select %p36, 0, %s35
      %s38 = sadd.s32 1, %s29
      %s39 = scalar_select %p36, %s38, %s29
      %p40 = scmp.ge.s32.totalorder %s39, 2
      %s41 = scalar_select %p40, 0, %s39
      %s42 = ssub.s32 %s29, %s41
      %p43 = scmp.eq.s32.totalorder %s42, 0
      %s45 = sadd.s32 %s44, 1
      %s46 = scalar_select %p43, %s44, %s45
      %p49 = pneg %p43
      %p50 = scmp.eq.s32.totalorder %s22, 17
      %p51 = por %p49, %p50
      %p52 = scmp.ne.s32.totalorder %s44, %s47
      %p53 = scmp.eq.s32.totalorder %s22, 0
      %p54 = por %p52, %p53
      %p55 = scmp.ne.s32.totalorder %s44, %s47
      %p56 = scmp.eq.s32.totalorder %s27, 17
      %p57 = por %p55, %p56
      %p58 = scmp.ne.s32.totalorder %s47, %s48
      %p59 = scmp.eq.s32.totalorder %s27, 0
      %p60 = por %p58, %p59
      %p61 = scmp.ne.s32.totalorder %s47, %s48
      %p62 = scmp.eq.s32.totalorder %s28, 17
      %p63 = por %p61, %p62
      %p65 = scmp.ne.s32.totalorder %s48, %s64
      %p66 = scmp.eq.s32.totalorder %s28, 0
      %p67 = por %p65, %p66
      %s68 = ssub.s32 %s29, %s41
      %s69 = ssub.s32 %s30, %s37
      %s70 = sor.u32 %s68, %s69
      %p71 = scmp.eq.s32.totalorder %s70, 0
      %s73 = sadd.s32 %s72, 1
      %s74 = scalar_select %p71, %s72, %s73
      %p77 = pneg %p71
      %p78 = scmp.eq.s32.totalorder %s22, 17
      %p79 = por %p77, %p78
      %p80 = scmp.ne.s32.totalorder %s72, %s75
      %p81 = scmp.eq.s32.totalorder %s22, 0
      %p82 = por %p80, %p81
      %p83 = scmp.ne.s32.totalorder %s72, %s75
      %p84 = scmp.eq.s32.totalorder %s27, 17
      %p85 = por %p83, %p84
      %p86 = scmp.ne.s32.totalorder %s75, %s76
      %p87 = scmp.eq.s32.totalorder %s27, 0
      %p88 = por %p86, %p87
      %p89 = scmp.ne.s32.totalorder %s75, %s76
      %p90 = scmp.eq.s32.totalorder %s28, 17
      %p91 = por %p89, %p90
      %p93 = scmp.ne.s32.totalorder %s76, %s92
      %p94 = scmp.eq.s32.totalorder %s28, 0
      %p95 = por %p93, %p94
      %s96 = ssub.s32 %s29, %s41
      %p97 = scmp.eq.s32.totalorder %s96, 0
      %s99 = sadd.s32 %s98, 1
      %s100 = scalar_select %p97, %s98, %s99
      %p103 = pneg %p97
      %p104 = scmp.eq.s32.totalorder %s22, 17
      %p105 = por %p103, %p104
      %p106 = scmp.ne.s32.totalorder %s98, %s101
      %p107 = scmp.eq.s32.totalorder %s22, 0
      %p108 = por %p106, %p107
      %p109 = scmp.ne.s32.totalorder %s98, %s101
      %p110 = scmp.eq.s32.totalorder %s27, 17
      %p111 = por %p109, %p110
      %p112 = scmp.ne.s32.totalorder %s101, %s102
      %p113 = scmp.eq.s32.totalorder %s27, 0
      %p114 = por %p112, %p113
      %p115 = scmp.ne.s32.totalorder %s101, %s102
      %p116 = scmp.eq.s32.totalorder %s28, 17
      %p117 = por %p115, %p116
      %p119 = scmp.ne.s32.totalorder %s102, %s118
      %p120 = scmp.eq.s32.totalorder %s28, 0
      %p121 = por %p119, %p120
      %s122 = ssub.s32 %s29, %s41
      %p123 = scmp.eq.s32.totalorder %s122, 0
      %s125 = sadd.s32 %s124, 1
      %s126 = scalar_select %p123, %s124, %s125
      %p129 = pneg %p123
      %p130 = scmp.eq.s32.totalorder %s22, 17
      %p131 = por %p129, %p130
      %p132 = scmp.ne.s32.totalorder %s124, %s127
      %p133 = scmp.eq.s32.totalorder %s22, 0
      %p134 = por %p132, %p133
      %p135 = scmp.ne.s32.totalorder %s124, %s127
      %p136 = scmp.eq.s32.totalorder %s27, 17
      %p137 = por %p135, %p136
      %p138 = scmp.ne.s32.totalorder %s127, %s128
      %p139 = scmp.eq.s32.totalorder %s27, 0
      %p140 = por %p138, %p139
      %p141 = scmp.ne.s32.totalorder %s127, %s128
      %p142 = scmp.eq.s32.totalorder %s28, 17
      %p143 = por %p141, %p142
      %p145 = scmp.ne.s32.totalorder %s128, %s144
      %p146 = scmp.eq.s32.totalorder %s28, 0
      %p147 = por %p145, %p146
      %s148 = ssub.s32 %s29, %s41
      %p149 = scmp.eq.s32.totalorder %s148, 0
      %s151 = sadd.s32 %s150, 1
      %s152 = scalar_select %p149, %s150, %s151
      %p155 = pneg %p149
      %p156 = scmp.eq.s32.totalorder %s22, 17
      %p157 = por %p155, %p156
      %p158 = scmp.ne.s32.totalorder %s150, %s153
      %p159 = scmp.eq.s32.totalorder %s22, 0
      %p160 = por %p158, %p159
      %p161 = scmp.ne.s32.totalorder %s150, %s153
      %p162 = scmp.eq.s32.totalorder %s27, 17
      %p163 = por %p161, %p162
      %p164 = scmp.ne.s32.totalorder %s153, %s154
      %p165 = scmp.eq.s32.totalorder %s27, 0
      %p166 = por %p164, %p165
      %p167 = scmp.ne.s32.totalorder %s153, %s154
      %p168 = scmp.eq.s32.totalorder %s28, 17
      %p169 = por %p167, %p168
      %p171 = scmp.ne.s32.totalorder %s154, %s170
      %p172 = scmp.eq.s32.totalorder %s28, 0
      %p173 = por %p171, %p172
      %p174 = scmp.le.s32.totalorder 1, %s22
      %p175 = scmp.lt.s32.totalorder %s22, 19
      %p176 = pnand %p174, %p175
      %p177 = pneg %p176
      // Predicated region
      $region9: #{tpu_custom_call.1} parent=5 // pred_check
        _
      $region10: #{tpu_custom_call.1} parent=5 // pred_check_branch
        %179 = sbr.rel (%p176) target = $region12
      $region11: #{tpu_custom_call.1} parent=5 // pred_region
        %s180 = ssub.s32 %s22, 1
      $region12: #{tpu_custom_call.1} parent=5 // pred_fallthru
        _
      %p181 = scmp.lt.s32.totalorder %s22, 18
      // Predicated region
      $region13: #{tpu_custom_call.1} parent=5 // pred_check
        %p182 = pneg %p181
      $region14: #{tpu_custom_call.1} parent=5 // pred_check_branch
        %184 = sbr.rel (%p182) target = $region16
      $region15: #{tpu_custom_call.1} parent=5 // pred_region
        // Predicated region
        $region17: #{tpu_custom_call.1} parent=15 // pred_check
          %p185 = pneg %p54
        $region18: #{tpu_custom_call.1} parent=15 // pred_check_branch
          %187 = sbr.rel (%p185) target = $region20
        $region19: #{tpu_custom_call.1} parent=15 // pred_region
          %s188 = sand.u32 %s44, 1
          %s189 = scalar_lea.sflag [#allocation5], %s188
          %s190 = sand.u32 %s44, 1
          %s191 = smul.addr %s190, 112
          %s192 = scalar_lea.vmem [#allocation4], %s191
          %s193 = smul.u32 2, %s29
          %s195 = ssub.s32 1792, 1792
          %196 = vsyncadd %s189, %s195
          %s197 = smul.addr %s193, 128
          %s198 = scalar_lea.hbm %s0, %s197
          %s199 = sshll.u32 %s192, 4
          %s200 = int_to_ptr.vmem [resolvable:$true] %s199
          %205 = dma.hbm_to_vmem [thread:$0]  %s198, 1792, %s200, %s189, 512, 256, 16
        $region20: #{tpu_custom_call.1} parent=15 // pred_fallthru
          _
        // Predicated region
        $region21: #{tpu_custom_call.1} parent=15 // pred_check
          %p206 = pneg %p82
        $region22: #{tpu_custom_call.1} parent=15 // pred_check_branch
          %208 = sbr.rel (%p206) target = $region24
        $region23: #{tpu_custom_call.1} parent=15 // pred_region
          %s209 = sand.u32 %s22, 1
          %s210 = scalar_lea.sflag [#allocation8], %s209
          %s211 = sand.u32 %s72, 1
          %s212 = smul.addr %s211, 512
          %s213 = scalar_lea.vmem [#allocation7], %s212
          %s215 = ssub.s32 8192, 8192
          %216 = vsyncadd %s210, %s215
          %s217 = smul.addr %s30, 64
          %s218 = smul.addr %s29, 576
          %s219 = sadd.s32 %s217, %s218
          %s220 = smul.addr %s219, 128
          %s221 = scalar_lea.hbm %s1, %s220
          %s222 = sshll.u32 %s213, 4
          %s223 = int_to_ptr.vmem [resolvable:$true] %s222
          %228 = dma.hbm_to_vmem [thread:$0]  %s221, 8192, %s223, %s210, 256, 256, 16
        $region24: #{tpu_custom_call.1} parent=15 // pred_fallthru
          _
        // Predicated region
        $region25: #{tpu_custom_call.1} parent=15 // pred_check
          %p229 = pneg %p108
        $region26: #{tpu_custom_call.1} parent=15 // pred_check_branch
          %231 = sbr.rel (%p229) target = $region28
        $region27: #{tpu_custom_call.1} parent=15 // pred_region
          %s232 = sand.u32 %s22, 1
          %s233 = scalar_lea.sflag [#allocation8], %s232
          %s234 = sand.u32 %s98, 1
          %s235 = smul.addr %s234, 2
          %s236 = scalar_lea.vmem [#allocation9], %s235
          %s237 = smul.u32 2, %s29
          %s239 = ssub.s32 32, 32
          %240 = vsyncadd %s233, %s239
          %s241 = smul.addr %s237, 16
          %s242 = scalar_lea.hbm %s2, %s241
          %s244 = sshll.u32 %s236, 4
          %s245 = int_to_ptr.vmem [resolvable:$true] %s244
          %247 = dma.hbm_to_vmem [thread:$0]  %s242, 32, %s245, %s233
        $region28: #{tpu_custom_call.1} parent=15 // pred_fallthru
          _
        // Predicated region
        $region29: #{tpu_custom_call.1} parent=15 // pred_check
          %p248 = pneg %p134
        $region30: #{tpu_custom_call.1} parent=15 // pred_check_branch
          %250 = sbr.rel (%p248) target = $region32
        $region31: #{tpu_custom_call.1} parent=15 // pred_region
          %s251 = sand.u32 %s124, 1
          %s252 = scalar_lea.sflag [#allocation11], %s251
          %s253 = sand.u32 %s124, 1
          %s254 = smul.addr %s253, 2
          %s255 = scalar_lea.vmem [#allocation10], %s254
          %s256 = smul.u32 2, %s29
          %s258 = ssub.s32 32, 32
          %259 = vsyncadd %s252, %s258
          %s260 = smul.addr %s256, 16
          %s261 = scalar_lea.hbm %s3, %s260
          %s263 = sshll.u32 %s255, 4
          %s264 = int_to_ptr.vmem [resolvable:$true] %s263
          %266 = dma.hbm_to_vmem [thread:$0]  %s261, 32, %s264, %s252
        $region32: #{tpu_custom_call.1} parent=15 // pred_fallthru
          _
      $region16: #{tpu_custom_call.1} parent=5 // pred_fallthru
        _
      %p267 = scmp.le.s32.totalorder 1, %s22
      %p268 = scmp.lt.s32.totalorder %s22, 19
      %p269 = pnand %p267, %p268
      %p270 = pneg %p269
      // Predicated region
      $region33: #{tpu_custom_call.1} parent=5 // pred_check
        _
      $region34: #{tpu_custom_call.1} parent=5 // pred_check_branch
        %272 = sbr.rel (%p269) target = $region36
      $region35: #{tpu_custom_call.1} parent=5 // pred_region
        %s273 = ssub.s32 %s22, 1
        %s274 = sand.u32 %s47, 1
        %s275 = scalar_lea.sflag [#allocation5], %s274
        %s276 = sand.u32 %s47, 1
        %s277 = smul.addr %s276, 112
        %s278 = scalar_lea.vmem [#allocation4], %s277
        // Predicated region
        $region37: #{tpu_custom_call.1} parent=35 // pred_check
          %p279 = pneg %p60
        $region38: #{tpu_custom_call.1} parent=35 // pred_check_branch
          %281 = sbr.rel (%p279) target = $region40
        $region39: #{tpu_custom_call.1} parent=35 // pred_region
          %282 = dma.done %s275, 1792
        $region40: #{tpu_custom_call.1} parent=35 // pred_fallthru
          _
        %s283 = sand.u32 %s27, 1
        %s284 = scalar_lea.sflag [#allocation8], %s283
        %s285 = sand.u32 %s75, 1
        %s286 = smul.addr %s285, 512
        %s287 = scalar_lea.vmem [#allocation7], %s286
        // Predicated region
        $region41: #{tpu_custom_call.1} parent=35 // pred_check
          %p288 = pneg %p88
        $region42: #{tpu_custom_call.1} parent=35 // pred_check_branch
          %290 = sbr.rel (%p288) target = $region44
        $region43: #{tpu_custom_call.1} parent=35 // pred_region
          %291 = dma.done %s284, 8192
        $region44: #{tpu_custom_call.1} parent=35 // pred_fallthru
          _
        %s292 = sand.u32 %s27, 1
        %s293 = scalar_lea.sflag [#allocation8], %s292
        %s294 = sand.u32 %s101, 1
        %s295 = smul.addr %s294, 2
        %s296 = scalar_lea.vmem [#allocation9], %s295
        // Predicated region
        $region45: #{tpu_custom_call.1} parent=35 // pred_check
          %p297 = pneg %p114
        $region46: #{tpu_custom_call.1} parent=35 // pred_check_branch
          %299 = sbr.rel (%p297) target = $region48
        $region47: #{tpu_custom_call.1} parent=35 // pred_region
          %300 = dma.done %s293, 32
        $region48: #{tpu_custom_call.1} parent=35 // pred_fallthru
          _
        %s301 = sand.u32 %s127, 1
        %s302 = scalar_lea.sflag [#allocation11], %s301
        %s303 = sand.u32 %s127, 1
        %s304 = smul.addr %s303, 2
        %s305 = scalar_lea.vmem [#allocation10], %s304
        // Predicated region
        $region49: #{tpu_custom_call.1} parent=35 // pred_check
          %p306 = pneg %p140
        $region50: #{tpu_custom_call.1} parent=35 // pred_check_branch
          %308 = sbr.rel (%p306) target = $region52
        $region51: #{tpu_custom_call.1} parent=35 // pred_region
          %309 = dma.done %s302, 32
        $region52: #{tpu_custom_call.1} parent=35 // pred_fallthru
          _
        %s310 = sand.u32 %s47, 1
        %s311 = scalar_lea.sflag [#allocation5], %s310
        %s312 = sand.u32 %s47, 1
        %s313 = smul.addr %s312, 112
        %s314 = scalar_lea.vmem [#allocation4], %s313
        %p315 = pneg %p60
        %p316 = pneg %p57
        %s317 = sand.u32 %s27, 1
        %s318 = scalar_lea.sflag [#allocation8], %s317
        %s319 = sand.u32 %s75, 1
        %s320 = smul.addr %s319, 512
        %s321 = scalar_lea.vmem [#allocation7], %s320
        %p322 = pneg %p88
        %p323 = pneg %p85
        %s324 = sand.u32 %s27, 1
        %s325 = scalar_lea.sflag [#allocation8], %s324
        %s326 = sand.u32 %s101, 1
        %s327 = smul.addr %s326, 2
        %s328 = scalar_lea.vmem [#allocation9], %s327
        %p329 = pneg %p114
        %p330 = pneg %p111
        %s331 = sand.u32 %s127, 1
        %s332 = scalar_lea.sflag [#allocation11], %s331
        %s333 = sand.u32 %s127, 1
        %s334 = smul.addr %s333, 2
        %s335 = scalar_lea.vmem [#allocation10], %s334
        %p336 = pneg %p140
        %p337 = pneg %p137
        %p338 = pneg %p166
        %p339 = pneg %p163
        %s340 = sand.u32 %s153, 1
        %s341 = scalar_lea.sflag [#allocation6], %s340
        %s342 = sand.u32 %s153, 1
        %s343 = smul.addr %s342, 112
        %s344 = scalar_lea.vmem [#allocation12], %s343
        %s345 = smul.u32 2, %s31
        %s346 = smul.u32 2, %s31
        %s347 = smul.u32 2, %s31
        %s348 = smul.u32 2, %s31
        %p349 = scmp.eq.s32.totalorder %s32, 0
        // Predicated region
        $region53: #{tpu_custom_call.1} parent=35 // pred_check
          %p350 = pneg %p349
        $region54: #{tpu_custom_call.1} parent=35 // pred_check_branch
          %352 = sbr.rel (%p350) target = $region56
        $region55: #{tpu_custom_call.1} parent=35 // pred_region
          %v353 = vld [vmem:[%s278] sm:$0xff]
          %v354 = vld [vmem:[%s278 + $0x8] sm:$0xff]
          %v355 = vld [vmem:[%s278 + $0x10] sm:$0xff]
          %v356 = vld [vmem:[%s278 + $0x18] sm:$0xff]
          %v357 = vld [vmem:[%s278 + $0x20] sm:$0xff]
          %v358 = vld [vmem:[%s278 + $0x28] sm:$0xff]
          %v359 = vld [vmem:[%s278 + $0x30] sm:$0xff]
          %v360 = vld [vmem:[%s278 + $0x38] sm:$0xff]
          %v361 = vld [vmem:[%s278 + $0x40] sm:$0xff]
          %v362 = vld [vmem:[%s278 + $0x48] sm:$0xff]
          %v363 = vld [vmem:[%s278 + $0x50] sm:$0xff]
          %v364 = vld [vmem:[%s278 + $0x58] sm:$0xff]
          %v365 = vld [vmem:[%s278 + $0x60] sm:$0x1]
          %v366 = vld [vmem:[%s278 + $0x68] sm:$0x1]
          %v367 = vadd.f32 %v353, %v355
          %v368 = vadd.f32 %v367, %v357
          %v369 = vadd.f32 %v368, %v359
          %v370 = vadd.f32 %v369, %v361
          %v371 = vadd.f32 %v370, %v363
          %vm372 = vcmask 1040384
          %v373 = vsel %vm372, %v365, 0.0
          %v374 = vadd.f32 %v371, %v373
          %v375 = vrot.slane %v374, 4
          %v376 = vadd.f32 %v374, %v375
          %v377 = vrot.slane %v376, 2
          %v378 = vadd.f32 %v376, %v377
          %v379 = vrot.slane %v378, 1
          %v380 = vadd.f32 %v378, %v379
          %v381 = vadd.f32 %v354, %v356
          %v382 = vadd.f32 %v381, %v358
          %v383 = vadd.f32 %v382, %v360
          %v384 = vadd.f32 %v383, %v362
          %v385 = vadd.f32 %v384, %v364
          %v386 = vsel %vm372, %v366, 0.0
          %v387 = vadd.f32 %v385, %v386
          %v388 = vrot.slane %v387, 4
          %v389 = vadd.f32 %v387, %v388
          %v390 = vrot.slane %v389, 2
          %v391 = vadd.f32 %v389, %v390
          %v392 = vrot.slane %v391, 1
          %v393 = vadd.f32 %v391, %v392
          %v394 = vmul.f32 %v380, 0.020408163
          %v395 = vmul.f32 %v393, 0.020408163
          %v396 = vsub.f32 %v353, %v394
          %v397 = vsub.f32 %v354, %v395
          %v398 = vsub.f32 %v355, %v394
          %v399 = vsub.f32 %v356, %v395
          %v400 = vsub.f32 %v357, %v394
          %v401 = vsub.f32 %v358, %v395
          %v402 = vsub.f32 %v359, %v394
          %v403 = vsub.f32 %v360, %v395
          %v404 = vsub.f32 %v361, %v394
          %v405 = vsub.f32 %v362, %v395
          %v406 = vsub.f32 %v363, %v394
          %v407 = vsub.f32 %v364, %v395
          %v408 = vsub.f32 %v365, %v394
          %v409 = vsub.f32 %v366, %v395
          %v410 = vmul.f32 %v396, %v396
          %v411 = vmul.f32 %v397, %v397
          %v412 = vmul.f32 %v398, %v398
          %v413 = vmul.f32 %v399, %v399
          %v414 = vmul.f32 %v400, %v400
          %v415 = vmul.f32 %v401, %v401
          %v416 = vmul.f32 %v402, %v402
          %v417 = vmul.f32 %v403, %v403
          %v418 = vmul.f32 %v404, %v404
          %v419 = vmul.f32 %v405, %v405
          %v420 = vmul.f32 %v406, %v406
          %v421 = vmul.f32 %v407, %v407
          %v422 = vmul.f32 %v408, %v408
          %v423 = vmul.f32 %v409, %v409
          %v424 = vadd.f32 %v410, %v412
          %v425 = vadd.f32 %v424, %v414
          %v426 = vadd.f32 %v425, %v416
          %v427 = vadd.f32 %v426, %v418
          %v428 = vadd.f32 %v427, %v420
          %v429 = vsel %vm372, %v422, 0.0
          %v430 = vadd.f32 %v428, %v429
          %v431 = vrot.slane %v430, 4
          %v432 = vadd.f32 %v430, %v431
          %v433 = vrot.slane %v432, 2
          %v434 = vadd.f32 %v432, %v433
          %v435 = vrot.slane %v434, 1
          %v436 = vadd.f32 %v434, %v435
          %v437 = vadd.f32 %v411, %v413
          %v438 = vadd.f32 %v437, %v415
          %v439 = vadd.f32 %v438, %v417
          %v440 = vadd.f32 %v439, %v419
          %v441 = vadd.f32 %v440, %v421
          %v442 = vsel %vm372, %v423, 0.0
          %v443 = vadd.f32 %v441, %v442
          %v444 = vrot.slane %v443, 4
          %v445 = vadd.f32 %v443, %v444
          %v446 = vrot.slane %v445, 2
          %v447 = vadd.f32 %v445, %v446
          %v448 = vrot.slane %v447, 1
          %v449 = vadd.f32 %v447, %v448
          %v450 = vmul.f32 %v436, 0.020408163
          %v451 = vmul.f32 %v449, 0.020408163
          %v452 = vld [vmem:[%s296] sm:$0x3]
          %v453 = vadd.f32 %v450, 1e-05
          %v454 = vadd.f32 %v451, 1e-05
          %v455 = vrsqrt.pop %v453
          %v456 = vrsqrt.pop %v454
          %v459 = vcombine.low %v455, %v456
          %v461 = vunpack.c.l.s4 1966171168
          %v462 = vunpack.c.0.s8 %v461
          %v463 = vlaneseq
          %v464 = vshrl.u32 %v463, 7
          %v465 = vsub.s32 %v462, %v464
          %v466 = vrot.slane %v459, %v465
          %v468 = vunpack.c.l.s4 1966171168
          %v469 = vunpack.c.0.s8 %v468
          %v470 = vlaneseq
          %v471 = vshrl.u32 %v470, 7
          %v472 = vsub.s32 %v469, %v471
          %v473 = vrot.slane %v466, %v472
          %v475 = vmul.f32 %v452, %v473
          %v477 = vlaneseq
          %v478 = vshrl.u32 %v477, 7
          %v479 = vsub.s32 0, %v478
          %v480 = vrot.slane %v475, %v479
          %v481 = vlaneseq
          %v482 = vshrl.u32 %v481, 7
          %v483 = vsub.s32 1, %v482
          %v484 = vrot.slane %v475, %v483
          %v487 = vmul.f32 %v396, %v480
          %v488 = vmul.f32 %v397, %v484
          %v489 = vmul.f32 %v398, %v480
          %v490 = vmul.f32 %v399, %v484
          %v491 = vmul.f32 %v400, %v480
          %v492 = vmul.f32 %v401, %v484
          %v493 = vmul.f32 %v402, %v480
          %v494 = vmul.f32 %v403, %v484
          %v495 = vmul.f32 %v404, %v480
          %v496 = vmul.f32 %v405, %v484
          %v497 = vmul.f32 %v406, %v480
          %v498 = vmul.f32 %v407, %v484
          %v499 = vmul.f32 %v408, %v480
          %v500 = vmul.f32 %v409, %v484
          %v501 = vld [vmem:[%s305] sm:$0x3]
          %v503 = vlaneseq
          %v504 = vshrl.u32 %v503, 7
          %v505 = vsub.s32 0, %v504
          %v506 = vrot.slane %v501, %v505
          %v507 = vlaneseq
          %v508 = vshrl.u32 %v507, 7
          %v509 = vsub.s32 1, %v508
          %v510 = vrot.slane %v501, %v509
          %v513 = vadd.f32 %v487, %v506
          %v514 = vadd.f32 %v488, %v510
          %v515 = vadd.f32 %v489, %v506
          %v516 = vadd.f32 %v490, %v510
          %v517 = vadd.f32 %v491, %v506
          %v518 = vadd.f32 %v492, %v510
          %v519 = vadd.f32 %v493, %v506
          %v520 = vadd.f32 %v494, %v510
          %v521 = vadd.f32 %v495, %v506
          %v522 = vadd.f32 %v496, %v510
          %v523 = vadd.f32 %v497, %v506
          %v524 = vadd.f32 %v498, %v510
          %v525 = vadd.f32 %v499, %v506
          %v526 = vadd.f32 %v500, %v510
          %v527 = vmax.f32 %v513, 0.0
          %v528 = vmax.f32 %v514, 0.0
          %v529 = vmax.f32 %v515, 0.0
          %v530 = vmax.f32 %v516, 0.0
          %v531 = vmax.f32 %v517, 0.0
          %v532 = vmax.f32 %v518, 0.0
          %v533 = vmax.f32 %v519, 0.0
          %v534 = vmax.f32 %v520, 0.0
          %v535 = vmax.f32 %v521, 0.0
          %v536 = vmax.f32 %v522, 0.0
          %v537 = vmax.f32 %v523, 0.0
          %v538 = vmax.f32 %v524, 0.0
          %v539 = vmax.f32 %v525, 0.0
          %v540 = vmax.f32 %v526, 0.0
          %541 = vst [vmem:[#allocation2] sm:$0xff] 0.0
          %542 = vst [vmem:[#allocation2 + $0x8] sm:$0xff] 0.0
          %543 = vst [vmem:[#allocation2 + $0x70] sm:$0xff] 0.0
          %544 = vst [vmem:[#allocation2 + $0x78] sm:$0xff] 0.0
          %545 = vst [vmem:[#allocation2 + $0x80] sm:$0xff] 0.0
          %546 = vst [vmem:[#allocation2 + $0x88] sm:$0xff] 0.0
          %547 = vst [vmem:[#allocation2 + $0x10] sm:$0xff] %v527
          %548 = vst [vmem:[#allocation2 + $0x18] sm:$0xff] %v528
          %549 = vst [vmem:[#allocation2 + $0x20] sm:$0xff] %v529
          %550 = vst [vmem:[#allocation2 + $0x28] sm:$0xff] %v530
          %551 = vst [vmem:[#allocation2 + $0x30] sm:$0xff] %v531
          %552 = vst [vmem:[#allocation2 + $0x38] sm:$0xff] %v532
          %553 = vst [vmem:[#allocation2 + $0x40] sm:$0xff] %v533
          %554 = vst [vmem:[#allocation2 + $0x48] sm:$0xff] %v534
          %555 = vst [vmem:[#allocation2 + $0x50] sm:$0xff] %v535
          %556 = vst [vmem:[#allocation2 + $0x58] sm:$0xff] %v536
          %557 = vst [vmem:[#allocation2 + $0x60] sm:$0xff] %v537
          %558 = vst [vmem:[#allocation2 + $0x68] sm:$0xff] %v538
          %559 = vst [vmem:[#allocation2 + $0x70] sm:$0x1] %v539
          %560 = vst [vmem:[#allocation2 + $0x78] sm:$0x1] %v540
          %v561 = vlaneseq
          %v562 = vshrl.u32 %v561, 7
          %v563 = vadd.s32 %v562, 8
          %v564 = vadd.s32 %v562, 16
          %v565 = vadd.s32 %v562, 24
          %v566 = vadd.s32 %v562, 32
          %v567 = vadd.s32 %v562, 40
          %v568 = vadd.s32 %v562, 48
          %vm569 = vcmp.lt.s32.totalorder %v562, 0
          %v570 = vsub.s32 0, %v562
          %v571 = vsel %vm569, %v570, %v562
          %v572 = vmul.u32.u64.compose %v571, 2454267026
          %v573 = vextract.low.u32 %v572
          %v574 = vextract.high.u32 %v572
          %vm575 = vc.u32 %v573, 2454267026
          %v576 = vsel %vm575, 1, 0
          %v577 = vadd.s32 %v574, %v576
          %v578 = vshrl.u32 %v577, 2
          %v579 = vmul.u32 %v578, 7
          %v580 = vsub.s32 %v571, %v579
          %v581 = vsub.s32 0, %v580
          %v582 = vsel %vm569, %v581, %v580
          %vm583 = vcmp.lt.s32.totalorder %v563, 0
          %v584 = vsub.s32 0, %v563
          %v585 = vsel %vm583, %v584, %v563
          %v586 = vmul.u32.u64.compose %v585, 2454267026
          %v587 = vextract.low.u32 %v586
          %v588 = vextract.high.u32 %v586
          %vm589 = vc.u32 %v587, 2454267026
          %v590 = vsel %vm589, 1, 0
          %v591 = vadd.s32 %v588, %v590
          %v592 = vshrl.u32 %v591, 2
          %v593 = vmul.u32 %v592, 7
          %v594 = vsub.s32 %v585, %v593
          %v595 = vsub.s32 0, %v594
          %v596 = vsel %vm583, %v595, %v594
          %vm597 = vcmp.lt.s32.totalorder %v564, 0
          %v598 = vsub.s32 0, %v564
          %v599 = vsel %vm597, %v598, %v564
          %v600 = vmul.u32.u64.compose %v599, 2454267026
          %v601 = vextract.low.u32 %v600
          %v602 = vextract.high.u32 %v600
          %vm603 = vc.u32 %v601, 2454267026
          %v604 = vsel %vm603, 1, 0
          %v605 = vadd.s32 %v602, %v604
          %v606 = vshrl.u32 %v605, 2
          %v607 = vmul.u32 %v606, 7
          %v608 = vsub.s32 %v599, %v607
          %v609 = vsub.s32 0, %v608
          %v610 = vsel %vm597, %v609, %v608
          %vm611 = vcmp.lt.s32.totalorder %v565, 0
          %v612 = vsub.s32 0, %v565
          %v613 = vsel %vm611, %v612, %v565
          %v614 = vmul.u32.u64.compose %v613, 2454267026
          %v615 = vextract.low.u32 %v614
          %v616 = vextract.high.u32 %v614
          %vm617 = vc.u32 %v615, 2454267026
          %v618 = vsel %vm617, 1, 0
          %v619 = vadd.s32 %v616, %v618
          %v620 = vshrl.u32 %v619, 2
          %v621 = vmul.u32 %v620, 7
          %v622 = vsub.s32 %v613, %v621
          %v623 = vsub.s32 0, %v622
          %v624 = vsel %vm611, %v623, %v622
          %vm625 = vcmp.lt.s32.totalorder %v566, 0
          %v626 = vsub.s32 0, %v566
          %v627 = vsel %vm625, %v626, %v566
          %v628 = vmul.u32.u64.compose %v627, 2454267026
          %v629 = vextract.low.u32 %v628
          %v630 = vextract.high.u32 %v628
          %vm631 = vc.u32 %v629, 2454267026
          %v632 = vsel %vm631, 1, 0
          %v633 = vadd.s32 %v630, %v632
          %v634 = vshrl.u32 %v633, 2
          %v635 = vmul.u32 %v634, 7
          %v636 = vsub.s32 %v627, %v635
          %v637 = vsub.s32 0, %v636
          %v638 = vsel %vm625, %v637, %v636
          %vm639 = vcmp.lt.s32.totalorder %v567, 0
          %v640 = vsub.s32 0, %v567
          %v641 = vsel %vm639, %v640, %v567
          %v642 = vmul.u32.u64.compose %v641, 2454267026
          %v643 = vextract.low.u32 %v642
          %v644 = vextract.high.u32 %v642
          %vm645 = vc.u32 %v643, 2454267026
          %v646 = vsel %vm645, 1, 0
          %v647 = vadd.s32 %v644, %v646
          %v648 = vshrl.u32 %v647, 2
          %v649 = vmul.u32 %v648, 7
          %v650 = vsub.s32 %v641, %v649
          %v651 = vsub.s32 0, %v650
          %v652 = vsel %vm639, %v651, %v650
          %vm653 = vcmp.lt.s32.totalorder %v568, 0
          %v654 = vsub.s32 0, %v568
          %v655 = vsel %vm653, %v654, %v568
          %v656 = vmul.u32.u64.compose %v655, 2454267026
          %v657 = vextract.low.u32 %v656
          %v658 = vextract.high.u32 %v656
          %vm659 = vc.u32 %v657, 2454267026
          %v660 = vsel %vm659, 1, 0
          %v661 = vadd.s32 %v658, %v660
          %v662 = vshrl.u32 %v661, 2
          %v663 = vmul.u32 %v662, 7
          %v664 = vsub.s32 %v655, %v663
          %v665 = vsub.s32 0, %v664
          %v666 = vsel %vm653, %v665, %v664
          %vm667 = vcmp.ne.s32.totalorder %v582, 0
          %vm668 = vcmp.ne.s32.totalorder %v596, 0
          %vm669 = vcmp.ne.s32.totalorder %v610, 0
          %vm670 = vcmp.ne.s32.totalorder %v624, 0
          %vm671 = vcmp.ne.s32.totalorder %v638, 0
          %vm672 = vcmp.ne.s32.totalorder %v652, 0
          %vm673 = vcmp.ne.s32.totalorder %v666, 0
          %vm674 = vcmp.lt.s32.totalorder %v582, 0
          %vm675 = vcmp.lt.s32.totalorder %v596, 0
          %vm676 = vcmp.lt.s32.totalorder %v610, 0
          %vm677 = vcmp.lt.s32.totalorder %v624, 0
          %vm678 = vcmp.lt.s32.totalorder %v638, 0
          %vm679 = vcmp.lt.s32.totalorder %v652, 0
          %vm680 = vcmp.lt.s32.totalorder %v666, 0
          %vm681 = vmand %vm674, %vm667
          %vm682 = vmand %vm675, %vm668
          %vm683 = vmand %vm676, %vm669
          %vm684 = vmand %vm677, %vm670
          %vm685 = vmand %vm678, %vm671
          %vm686 = vmand %vm679, %vm672
          %vm687 = vmand %vm680, %vm673
          %v688 = vadd.s32 %v582, 7
          %v689 = vadd.s32 %v596, 7
          %v690 = vadd.s32 %v610, 7
          %v691 = vadd.s32 %v624, 7
          %v692 = vadd.s32 %v638, 7
          %v693 = vadd.s32 %v652, 7
          %v694 = vadd.s32 %v666, 7
          %v695 = vsel %vm681, %v688, %v582
          %v696 = vsel %vm682, %v689, %v596
          %v697 = vsel %vm683, %v690, %v610
          %v698 = vsel %vm684, %v691, %v624
          %v699 = vsel %vm685, %v692, %v638
          %v700 = vsel %vm686, %v693, %v652
          %v701 = vsel %vm687, %v694, %v666
          %vm702 = vcmp.ge.s32.totalorder %v695, 1
          %vm703 = vcmp.ge.s32.totalorder %v696, 1
          %vm704 = vcmp.ge.s32.totalorder %v697, 1
          %vm705 = vcmp.ge.s32.totalorder %v698, 1
          %vm706 = vcmp.ge.s32.totalorder %v699, 1
          %vm707 = vcmp.ge.s32.totalorder %v700, 1
          %vm708 = vcmp.ge.s32.totalorder %v701, 1
          %v709 = vsel %vm702, 1, 0
          %v710 = vsel %vm703, 1, 0
          %v711 = vsel %vm704, 1, 0
          %v712 = vsel %vm705, 1, 0
          %v713 = vsel %vm706, 1, 0
          %v714 = vsel %vm707, 1, 0
          %v715 = vsel %vm708, 1, 0
          %v716 = vcvt.s32.f32 %v709
          %v717 = vcvt.s32.f32 %v710
          %v718 = vcvt.s32.f32 %v711
          %v719 = vcvt.s32.f32 %v712
          %v720 = vcvt.s32.f32 %v713
          %v721 = vcvt.s32.f32 %v714
          %v722 = vcvt.s32.f32 %v715
          %vm723 = vcmp.le.s32.totalorder %v695, 5
          %vm724 = vcmp.le.s32.totalorder %v696, 5
          %vm725 = vcmp.le.s32.totalorder %v697, 5
          %vm726 = vcmp.le.s32.totalorder %v698, 5
          %vm727 = vcmp.le.s32.totalorder %v699, 5
          %vm728 = vcmp.le.s32.totalorder %v700, 5
          %vm729 = vcmp.le.s32.totalorder %v701, 5
          %v730 = vsel %vm723, 1, 0
          %v731 = vsel %vm724, 1, 0
          %v732 = vsel %vm725, 1, 0
          %v733 = vsel %vm726, 1, 0
          %v734 = vsel %vm727, 1, 0
          %v735 = vsel %vm728, 1, 0
          %v736 = vsel %vm729, 1, 0
          %v737 = vcvt.s32.f32 %v730
          %v738 = vcvt.s32.f32 %v731
          %v739 = vcvt.s32.f32 %v732
          %v740 = vcvt.s32.f32 %v733
          %v741 = vcvt.s32.f32 %v734
          %v742 = vcvt.s32.f32 %v735
          %v743 = vcvt.s32.f32 %v736
          %v744 = vld [vmem:[#allocation2] sm:$0xff]
          %v745 = vld [vmem:[#allocation2 + $0x8] sm:$0xff]
          %v746 = vld [vmem:[#allocation2 + $0x10] sm:$0xff]
          %v747 = vld [vmem:[#allocation2 + $0x18] sm:$0xff]
          %v748 = vld [vmem:[#allocation2 + $0x20] sm:$0xff]
          %v749 = vld [vmem:[#allocation2 + $0x28] sm:$0xff]
          %v750 = vld [vmem:[#allocation2 + $0x30] sm:$0xff]
          %v751 = vld [vmem:[#allocation2 + $0x38] sm:$0xff]
          %v752 = vld [vmem:[#allocation2 + $0x40] sm:$0xff]
          %v753 = vld [vmem:[#allocation2 + $0x48] sm:$0xff]
          %v754 = vld [vmem:[#allocation2 + $0x50] sm:$0xff]
          %v755 = vld [vmem:[#allocation2 + $0x58] sm:$0xff]
          %v756 = vld [vmem:[#allocation2 + $0x60] sm:$0x1]
          %v757 = vld [vmem:[#allocation2 + $0x68] sm:$0x1]
          %v758 = vmul.f32 %v744, %v716
          %v759 = vmul.f32 %v745, %v716
          %v760 = vmul.f32 %v746, %v717
          %v761 = vmul.f32 %v747, %v717
          %v762 = vmul.f32 %v748, %v718
          %v763 = vmul.f32 %v749, %v718
          %v764 = vmul.f32 %v750, %v719
          %v765 = vmul.f32 %v751, %v719
          %v766 = vmul.f32 %v752, %v720
          %v767 = vmul.f32 %v753, %v720
          %v768 = vmul.f32 %v754, %v721
          %v769 = vmul.f32 %v755, %v721
          %v770 = vmul.f32 %v756, %v722
          %v771 = vmul.f32 %v757, %v722
          %772 = vst [vmem:[#allocation3] sm:$0xff] %v758
          %773 = vst [vmem:[#allocation3 + $0x8] sm:$0xff] %v759
          %774 = vst [vmem:[#allocation3 + $0x10] sm:$0xff] %v760
          %775 = vst [vmem:[#allocation3 + $0x18] sm:$0xff] %v761
          %776 = vst [vmem:[#allocation3 + $0x20] sm:$0xff] %v762
          %777 = vst [vmem:[#allocation3 + $0x28] sm:$0xff] %v763
          %778 = vst [vmem:[#allocation3 + $0x30] sm:$0xff] %v764
          %779 = vst [vmem:[#allocation3 + $0x38] sm:$0xff] %v765
          %780 = vst [vmem:[#allocation3 + $0x40] sm:$0xff] %v766
          %781 = vst [vmem:[#allocation3 + $0x48] sm:$0xff] %v767
          %782 = vst [vmem:[#allocation3 + $0x50] sm:$0xff] %v768
          %783 = vst [vmem:[#allocation3 + $0x58] sm:$0xff] %v769
          %784 = vst [vmem:[#allocation3 + $0x60] sm:$0x1] %v770
          %785 = vst [vmem:[#allocation3 + $0x68] sm:$0x1] %v771
          %v786 = vld [vmem:[#allocation2] sm:$0xfe]
          %v787 = vld [vmem:[#allocation2 + $0x8] sm:$0xfe]
          %v788 = vld [vmem:[#allocation2 + $0x10] sm:$0xff]
          %v789 = vld [vmem:[#allocation2 + $0x18] sm:$0xff]
          %v790 = vld [vmem:[#allocation2 + $0x20] sm:$0xff]
          %v791 = vld [vmem:[#allocation2 + $0x28] sm:$0xff]
          %v792 = vld [vmem:[#allocation2 + $0x30] sm:$0xff]
          %v793 = vld [vmem:[#allocation2 + $0x38] sm:$0xff]
          %v794 = vld [vmem:[#allocation2 + $0x40] sm:$0xff]
          %v795 = vld [vmem:[#allocation2 + $0x48] sm:$0xff]
          %v796 = vld [vmem:[#allocation2 + $0x50] sm:$0xff]
          %v797 = vld [vmem:[#allocation2 + $0x58] sm:$0xff]
          %v798 = vld [vmem:[#allocation2 + $0x60] sm:$0x3]
          %v799 = vld [vmem:[#allocation2 + $0x68] sm:$0x3]
          %vm814 = vcmask 1046528
          %v815 = vrot.slane %v786, 1
          %v816 = vrot.slane %v788, 1
          %v817 = vsel %vm814, %v815, %v816
          %v818 = vrot.slane %v787, 1
          %v819 = vrot.slane %v789, 1
          %v820 = vsel %vm814, %v818, %v819
          %v821 = vrot.slane %v790, 1
          %v822 = vsel %vm814, %v816, %v821
          %v823 = vrot.slane %v791, 1
          %v824 = vsel %vm814, %v819, %v823
          %v825 = vrot.slane %v792, 1
          %v826 = vsel %vm814, %v821, %v825
          %v827 = vrot.slane %v793, 1
          %v828 = vsel %vm814, %v823, %v827
          %v829 = vrot.slane %v794, 1
          %v830 = vsel %vm814, %v825, %v829
          %v831 = vrot.slane %v795, 1
          %v832 = vsel %vm814, %v827, %v831
          %v833 = vrot.slane %v796, 1
          %v834 = vsel %vm814, %v829, %v833
          %v835 = vrot.slane %v797, 1
          %v836 = vsel %vm814, %v831, %v835
          %v837 = vrot.slane %v798, 1
          %v838 = vsel %vm814, %v833, %v837
          %v839 = vrot.slane %v799, 1
          %v840 = vsel %vm814, %v835, %v839
          %s855 = scalar_lea.vmem [#allocation3], 112
          %856 = vst [vmem:[%s855] sm:$0xff] %v817
          %857 = vst [vmem:[%s855 + $0x8] sm:$0xff] %v820
          %858 = vst [vmem:[%s855 + $0x10] sm:$0xff] %v822
          %859 = vst [vmem:[%s855 + $0x18] sm:$0xff] %v824
          %860 = vst [vmem:[%s855 + $0x20] sm:$0xff] %v826
          %861 = vst [vmem:[%s855 + $0x28] sm:$0xff] %v828
          %862 = vst [vmem:[%s855 + $0x30] sm:$0xff] %v830
          %863 = vst [vmem:[%s855 + $0x38] sm:$0xff] %v832
          %864 = vst [vmem:[%s855 + $0x40] sm:$0xff] %v834
          %865 = vst [vmem:[%s855 + $0x48] sm:$0xff] %v836
          %866 = vst [vmem:[%s855 + $0x50] sm:$0xff] %v838
          %867 = vst [vmem:[%s855 + $0x58] sm:$0xff] %v840
          %868 = vst [vmem:[%s855 + $0x60] sm:$0x1] %v837
          %869 = vst [vmem:[%s855 + $0x68] sm:$0x1] %v839
          %v870 = vld [vmem:[#allocation2] sm:$0xfc]
          %v871 = vld [vmem:[#allocation2 + $0x8] sm:$0xfc]
          %v872 = vld [vmem:[#allocation2 + $0x10] sm:$0xff]
          %v873 = vld [vmem:[#allocation2 + $0x18] sm:$0xff]
          %v874 = vld [vmem:[#allocation2 + $0x20] sm:$0xff]
          %v875 = vld [vmem:[#allocation2 + $0x28] sm:$0xff]
          %v876 = vld [vmem:[#allocation2 + $0x30] sm:$0xff]
          %v877 = vld [vmem:[#allocation2 + $0x38] sm:$0xff]
          %v878 = vld [vmem:[#allocation2 + $0x40] sm:$0xff]
          %v879 = vld [vmem:[#allocation2 + $0x48] sm:$0xff]
          %v880 = vld [vmem:[#allocation2 + $0x50] sm:$0xff]
          %v881 = vld [vmem:[#allocation2 + $0x58] sm:$0xff]
          %v882 = vld [vmem:[#allocation2 + $0x60] sm:$0x7]
          %v883 = vld [vmem:[#allocation2 + $0x68] sm:$0x7]
          %vm891 = vcmask 1041408
          %v892 = vrot.slane %v737, 6
          %v893 = vrot.slane %v738, 6
          %v894 = vsel %vm891, %v892, %v893
          %v895 = vrot.slane %v739, 6
          %v896 = vsel %vm891, %v893, %v895
          %v897 = vrot.slane %v740, 6
          %v898 = vsel %vm891, %v895, %v897
          %v899 = vrot.slane %v741, 6
          %v900 = vsel %vm891, %v897, %v899
          %v901 = vrot.slane %v742, 6
          %v902 = vsel %vm891, %v899, %v901
          %v903 = vrot.slane %v743, 6
          %v904 = vsel %vm891, %v901, %v903
          %v912 = vmul.f32 %v870, %v892
          %v913 = vmul.f32 %v871, %v892
          %v914 = vmul.f32 %v872, %v894
          %v915 = vmul.f32 %v873, %v894
          %v916 = vmul.f32 %v874, %v896
          %v917 = vmul.f32 %v875, %v896
          %v918 = vmul.f32 %v876, %v898
          %v919 = vmul.f32 %v877, %v898
          %v920 = vmul.f32 %v878, %v900
          %v921 = vmul.f32 %v879, %v900
          %v922 = vmul.f32 %v880, %v902
          %v923 = vmul.f32 %v881, %v902
          %v924 = vmul.f32 %v882, %v904
          %v925 = vmul.f32 %v883, %v904
          %vm940 = vcmask 1045504
          %v941 = vrot.slane %v912, 2
          %v942 = vrot.slane %v914, 2
          %v943 = vsel %vm940, %v941, %v942
          %v944 = vrot.slane %v913, 2
          %v945 = vrot.slane %v915, 2
          %v946 = vsel %vm940, %v944, %v945
          %v947 = vrot.slane %v916, 2
          %v948 = vsel %vm940, %v942, %v947
          %v949 = vrot.slane %v917, 2
          %v950 = vsel %vm940, %v945, %v949
          %v951 = vrot.slane %v918, 2
          %v952 = vsel %vm940, %v947, %v951
          %v953 = vrot.slane %v919, 2
          %v954 = vsel %vm940, %v949, %v953
          %v955 = vrot.slane %v920, 2
          %v956 = vsel %vm940, %v951, %v955
          %v957 = vrot.slane %v921, 2
          %v958 = vsel %vm940, %v953, %v957
          %v959 = vrot.slane %v922, 2
          %v960 = vsel %vm940, %v955, %v959
          %v961 = vrot.slane %v923, 2
          %v962 = vsel %vm940, %v957, %v961
          %v963 = vrot.slane %v924, 2
          %v964 = vsel %vm940, %v959, %v963
          %v965 = vrot.slane %v925, 2
          %v966 = vsel %vm940, %v961, %v965
          %s981 = scalar_lea.vmem [#allocation3], 224
          %982 = vst [vmem:[%s981] sm:$0xff] %v943
          %983 = vst [vmem:[%s981 + $0x8] sm:$0xff] %v946
          %984 = vst [vmem:[%s981 + $0x10] sm:$0xff] %v948
          %985 = vst [vmem:[%s981 + $0x18] sm:$0xff] %v950
          %986 = vst [vmem:[%s981 + $0x20] sm:$0xff] %v952
          %987 = vst [vmem:[%s981 + $0x28] sm:$0xff] %v954
          %988 = vst [vmem:[%s981 + $0x30] sm:$0xff] %v956
          %989 = vst [vmem:[%s981 + $0x38] sm:$0xff] %v958
          %990 = vst [vmem:[%s981 + $0x40] sm:$0xff] %v960
          %991 = vst [vmem:[%s981 + $0x48] sm:$0xff] %v962
          %992 = vst [vmem:[%s981 + $0x50] sm:$0xff] %v964
          %993 = vst [vmem:[%s981 + $0x58] sm:$0xff] %v966
          %994 = vst [vmem:[%s981 + $0x60] sm:$0x1] %v963
          %995 = vst [vmem:[%s981 + $0x68] sm:$0x1] %v965
          %v996 = vld [vmem:[#allocation2] sm:$0x80]
          %v997 = vld [vmem:[#allocation2 + $0x8] sm:$0x80]
          %v998 = vld [vmem:[#allocation2 + $0x10] sm:$0xff]
          %v999 = vld [vmem:[#allocation2 + $0x18] sm:$0xff]
          %v1000 = vld [vmem:[#allocation2 + $0x20] sm:$0xff]
          %v1001 = vld [vmem:[#allocation2 + $0x28] sm:$0xff]
          %v1002 = vld [vmem:[#allocation2 + $0x30] sm:$0xff]
          %v1003 = vld [vmem:[#allocation2 + $0x38] sm:$0xff]
          %v1004 = vld [vmem:[#allocation2 + $0x40] sm:$0xff]
          %v1005 = vld [vmem:[#allocation2 + $0x48] sm:$0xff]
          %v1006 = vld [vmem:[#allocation2 + $0x50] sm:$0xff]
          %v1007 = vld [vmem:[#allocation2 + $0x58] sm:$0xff]
          %v1008 = vld [vmem:[#allocation2 + $0x60] sm:$0xff]
          %v1009 = vld [vmem:[#allocation2 + $0x68] sm:$0xff]
          %v1017 = vrot.slane %v716, 1
          %v1018 = vrot.slane %v717, 1
          %v1019 = vsel %vm814, %v1017, %v1018
          %v1020 = vrot.slane %v718, 1
          %v1021 = vsel %vm814, %v1018, %v1020
          %v1022 = vrot.slane %v719, 1
          %v1023 = vsel %vm814, %v1020, %v1022
          %v1024 = vrot.slane %v720, 1
          %v1025 = vsel %vm814, %v1022, %v1024
          %v1026 = vrot.slane %v721, 1
          %v1027 = vsel %vm814, %v1024, %v1026
          %v1028 = vrot.slane %v722, 1
          %v1029 = vsel %vm814, %v1026, %v1028
          %v1037 = vmul.f32 %v996, %v1017
          %v1038 = vmul.f32 %v997, %v1017
          %v1039 = vmul.f32 %v998, %v1019
          %v1040 = vmul.f32 %v999, %v1019
          %v1041 = vmul.f32 %v1000, %v1021
          %v1042 = vmul.f32 %v1001, %v1021
          %v1043 = vmul.f32 %v1002, %v1023
          %v1044 = vmul.f32 %v1003, %v1023
          %v1045 = vmul.f32 %v1004, %v1025
          %v1046 = vmul.f32 %v1005, %v1025
          %v1047 = vmul.f32 %v1006, %v1027
          %v1048 = vmul.f32 %v1007, %v1027
          %v1049 = vmul.f32 %v1008, %v1029
          %v1050 = vmul.f32 %v1009, %v1029
          %v1065 = vrot.slane %v1037, 7
          %v1066 = vrot.slane %v1039, 7
          %v1067 = vsel %vm372, %v1065, %v1066
          %v1068 = vrot.slane %v1038, 7
          %v1069 = vrot.slane %v1040, 7
          %v1070 = vsel %vm372, %v1068, %v1069
          %v1071 = vrot.slane %v1041, 7
          %v1072 = vsel %vm372, %v1066, %v1071
          %v1073 = vrot.slane %v1042, 7
          %v1074 = vsel %vm372, %v1069, %v1073
          %v1075 = vrot.slane %v1043, 7
          %v1076 = vsel %vm372, %v1071, %v1075
          %v1077 = vrot.slane %v1044, 7
          %v1078 = vsel %vm372, %v1073, %v1077
          %v1079 = vrot.slane %v1045, 7
          %v1080 = vsel %vm372, %v1075, %v1079
          %v1081 = vrot.slane %v1046, 7
          %v1082 = vsel %vm372, %v1077, %v1081
          %v1083 = vrot.slane %v1047, 7
          %v1084 = vsel %vm372, %v1079, %v1083
          %v1085 = vrot.slane %v1048, 7
          %v1086 = vsel %vm372, %v1081, %v1085
          %v1087 = vrot.slane %v1049, 7
          %v1088 = vsel %vm372, %v1083, %v1087
          %v1089 = vrot.slane %v1050, 7
          %v1090 = vsel %vm372, %v1085, %v1089
          %s1105 = scalar_lea.vmem [#allocation3], 336
          %1106 = vst [vmem:[%s1105] sm:$0xff] %v1067
          %1107 = vst [vmem:[%s1105 + $0x8] sm:$0xff] %v1070
          %1108 = vst [vmem:[%s1105 + $0x10] sm:$0xff] %v1072
          %1109 = vst [vmem:[%s1105 + $0x18] sm:$0xff] %v1074
          %1110 = vst [vmem:[%s1105 + $0x20] sm:$0xff] %v1076
          %1111 = vst [vmem:[%s1105 + $0x28] sm:$0xff] %v1078
          %1112 = vst [vmem:[%s1105 + $0x30] sm:$0xff] %v1080
          %1113 = vst [vmem:[%s1105 + $0x38] sm:$0xff] %v1082
          %1114 = vst [vmem:[%s1105 + $0x40] sm:$0xff] %v1084
          %1115 = vst [vmem:[%s1105 + $0x48] sm:$0xff] %v1086
          %1116 = vst [vmem:[%s1105 + $0x50] sm:$0xff] %v1088
          %1117 = vst [vmem:[%s1105 + $0x58] sm:$0xff] %v1090
          %1118 = vst [vmem:[%s1105 + $0x60] sm:$0x1] %v1087
          %1119 = vst [vmem:[%s1105 + $0x68] sm:$0x1] %v1089
          %v1120 = vld [vmem:[#allocation2 + $0x10] sm:$0xff]
          %v1121 = vld [vmem:[#allocation2 + $0x18] sm:$0xff]
          %v1122 = vld [vmem:[#allocation2 + $0x20] sm:$0xff]
          %v1123 = vld [vmem:[#allocation2 + $0x28] sm:$0xff]
          %v1124 = vld [vmem:[#allocation2 + $0x30] sm:$0xff]
          %v1125 = vld [vmem:[#allocation2 + $0x38] sm:$0xff]
          %v1126 = vld [vmem:[#allocation2 + $0x40] sm:$0xff]
          %v1127 = vld [vmem:[#allocation2 + $0x48] sm:$0xff]
          %v1128 = vld [vmem:[#allocation2 + $0x50] sm:$0xff]
          %v1129 = vld [vmem:[#allocation2 + $0x58] sm:$0xff]
          %v1130 = vld [vmem:[#allocation2 + $0x60] sm:$0xff]
          %v1131 = vld [vmem:[#allocation2 + $0x68] sm:$0xff]
          %v1132 = vld [vmem:[#allocation2 + $0x70] sm:$0x1]
          %v1133 = vld [vmem:[#allocation2 + $0x78] sm:$0x1]
          %s1134 = scalar_lea.vmem [#allocation3], 448
          %1135 = vst [vmem:[%s1134] sm:$0xff] %v1120
          %1136 = vst [vmem:[%s1134 + $0x8] sm:$0xff] %v1121
          %1137 = vst [vmem:[%s1134 + $0x10] sm:$0xff] %v1122
          %1138 = vst [vmem:[%s1134 + $0x18] sm:$0xff] %v1123
          %1139 = vst [vmem:[%s1134 + $0x20] sm:$0xff] %v1124
          %1140 = vst [vmem:[%s1134 + $0x28] sm:$0xff] %v1125
          %1141 = vst [vmem:[%s1134 + $0x30] sm:$0xff] %v1126
          %1142 = vst [vmem:[%s1134 + $0x38] sm:$0xff] %v1127
          %1143 = vst [vmem:[%s1134 + $0x40] sm:$0xff] %v1128
          %1144 = vst [vmem:[%s1134 + $0x48] sm:$0xff] %v1129
          %1145 = vst [vmem:[%s1134 + $0x50] sm:$0xff] %v1130
          %1146 = vst [vmem:[%s1134 + $0x58] sm:$0xff] %v1131
          %1147 = vst [vmem:[%s1134 + $0x60] sm:$0x1] %v1132
          %1148 = vst [vmem:[%s1134 + $0x68] sm:$0x1] %v1133
          %v1149 = vld [vmem:[#allocation2 + $0x10] sm:$0xfe]
          %v1150 = vld [vmem:[#allocation2 + $0x18] sm:$0xfe]
          %v1151 = vld [vmem:[#allocation2 + $0x20] sm:$0xff]
          %v1152 = vld [vmem:[#allocation2 + $0x28] sm:$0xff]
          %v1153 = vld [vmem:[#allocation2 + $0x30] sm:$0xff]
          %v1154 = vld [vmem:[#allocation2 + $0x38] sm:$0xff]
          %v1155 = vld [vmem:[#allocation2 + $0x40] sm:$0xff]
          %v1156 = vld [vmem:[#allocation2 + $0x48] sm:$0xff]
          %v1157 = vld [vmem:[#allocation2 + $0x50] sm:$0xff]
          %v1158 = vld [vmem:[#allocation2 + $0x58] sm:$0xff]
          %v1159 = vld [vmem:[#allocation2 + $0x60] sm:$0xff]
          %v1160 = vld [vmem:[#allocation2 + $0x68] sm:$0xff]
          %v1161 = vld [vmem:[#allocation2 + $0x70] sm:$0x3]
          %v1162 = vld [vmem:[#allocation2 + $0x78] sm:$0x3]
          %v1163 = vrot.slane %v737, 7
          %v1164 = vrot.slane %v738, 7
          %v1165 = vsel %vm372, %v1163, %v1164
          %v1166 = vrot.slane %v739, 7
          %v1167 = vsel %vm372, %v1164, %v1166
          %v1168 = vrot.slane %v740, 7
          %v1169 = vsel %vm372, %v1166, %v1168
          %v1170 = vrot.slane %v741, 7
          %v1171 = vsel %vm372, %v1168, %v1170
          %v1172 = vrot.slane %v742, 7
          %v1173 = vsel %vm372, %v1170, %v1172
          %v1174 = vrot.slane %v743, 7
          %v1175 = vsel %vm372, %v1172, %v1174
          %v1183 = vmul.f32 %v1149, %v1163
          %v1184 = vmul.f32 %v1150, %v1163
          %v1185 = vmul.f32 %v1151, %v1165
          %v1186 = vmul.f32 %v1152, %v1165
          %v1187 = vmul.f32 %v1153, %v1167
          %v1188 = vmul.f32 %v1154, %v1167
          %v1189 = vmul.f32 %v1155, %v1169
          %v1190 = vmul.f32 %v1156, %v1169
          %v1191 = vmul.f32 %v1157, %v1171
          %v1192 = vmul.f32 %v1158, %v1171
          %v1193 = vmul.f32 %v1159, %v1173
          %v1194 = vmul.f32 %v1160, %v1173
          %v1195 = vmul.f32 %v1161, %v1175
          %v1196 = vmul.f32 %v1162, %v1175
          %v1211 = vrot.slane %v1183, 1
          %v1212 = vrot.slane %v1185, 1
          %v1213 = vsel %vm814, %v1211, %v1212
          %v1214 = vrot.slane %v1184, 1
          %v1215 = vrot.slane %v1186, 1
          %v1216 = vsel %vm814, %v1214, %v1215
          %v1217 = vrot.slane %v1187, 1
          %v1218 = vsel %vm814, %v1212, %v1217
          %v1219 = vrot.slane %v1188, 1
          %v1220 = vsel %vm814, %v1215, %v1219
          %v1221 = vrot.slane %v1189, 1
          %v1222 = vsel %vm814, %v1217, %v1221
          %v1223 = vrot.slane %v1190, 1
          %v1224 = vsel %vm814, %v1219, %v1223
          %v1225 = vrot.slane %v1191, 1
          %v1226 = vsel %vm814, %v1221, %v1225
          %v1227 = vrot.slane %v1192, 1
          %v1228 = vsel %vm814, %v1223, %v1227
          %v1229 = vrot.slane %v1193, 1
          %v1230 = vsel %vm814, %v1225, %v1229
          %v1231 = vrot.slane %v1194, 1
          %v1232 = vsel %vm814, %v1227, %v1231
          %v1233 = vrot.slane %v1195, 1
          %v1234 = vsel %vm814, %v1229, %v1233
          %v1235 = vrot.slane %v1196, 1
          %v1236 = vsel %vm814, %v1231, %v1235
          %s1251 = scalar_lea.vmem [#allocation3], 560
          %1252 = vst [vmem:[%s1251] sm:$0xff] %v1213
          %1253 = vst [vmem:[%s1251 + $0x8] sm:$0xff] %v1216
          %1254 = vst [vmem:[%s1251 + $0x10] sm:$0xff] %v1218
          %1255 = vst [vmem:[%s1251 + $0x18] sm:$0xff] %v1220
          %1256 = vst [vmem:[%s1251 + $0x20] sm:$0xff] %v1222
          %1257 = vst [vmem:[%s1251 + $0x28] sm:$0xff] %v1224
          %1258 = vst [vmem:[%s1251 + $0x30] sm:$0xff] %v1226
          %1259 = vst [vmem:[%s1251 + $0x38] sm:$0xff] %v1228
          %1260 = vst [vmem:[%s1251 + $0x40] sm:$0xff] %v1230
          %1261 = vst [vmem:[%s1251 + $0x48] sm:$0xff] %v1232
          %1262 = vst [vmem:[%s1251 + $0x50] sm:$0xff] %v1234
          %1263 = vst [vmem:[%s1251 + $0x58] sm:$0xff] %v1236
          %1264 = vst [vmem:[%s1251 + $0x60] sm:$0x1] %v1233
          %1265 = vst [vmem:[%s1251 + $0x68] sm:$0x1] %v1235
          %v1266 = vld [vmem:[#allocation2 + $0x10] sm:$0xc0]
          %v1267 = vld [vmem:[#allocation2 + $0x18] sm:$0xc0]
          %v1268 = vld [vmem:[#allocation2 + $0x20] sm:$0xff]
          %v1269 = vld [vmem:[#allocation2 + $0x28] sm:$0xff]
          %v1270 = vld [vmem:[#allocation2 + $0x30] sm:$0xff]
          %v1271 = vld [vmem:[#allocation2 + $0x38] sm:$0xff]
          %v1272 = vld [vmem:[#allocation2 + $0x40] sm:$0xff]
          %v1273 = vld [vmem:[#allocation2 + $0x48] sm:$0xff]
          %v1274 = vld [vmem:[#allocation2 + $0x50] sm:$0xff]
          %v1275 = vld [vmem:[#allocation2 + $0x58] sm:$0xff]
          %v1276 = vld [vmem:[#allocation2 + $0x60] sm:$0xff]
          %v1277 = vld [vmem:[#allocation2 + $0x68] sm:$0xff]
          %v1278 = vld [vmem:[#allocation2 + $0x70] sm:$0x7f]
          %v1279 = vld [vmem:[#allocation2 + $0x78] sm:$0x7f]
          %v1280 = vrot.slane %v716, 2
          %v1281 = vrot.slane %v717, 2
          %v1282 = vsel %vm940, %v1280, %v1281
          %v1283 = vrot.slane %v718, 2
          %v1284 = vsel %vm940, %v1281, %v1283
          %v1285 = vrot.slane %v719, 2
          %v1286 = vsel %vm940, %v1283, %v1285
          %v1287 = vrot.slane %v720, 2
          %v1288 = vsel %vm940, %v1285, %v1287
          %v1289 = vrot.slane %v721, 2
          %v1290 = vsel %vm940, %v1287, %v1289
          %v1291 = vrot.slane %v722, 2
          %v1292 = vsel %vm940, %v1289, %v1291
          %v1300 = vmul.f32 %v1266, %v1280
          %v1301 = vmul.f32 %v1267, %v1280
          %v1302 = vmul.f32 %v1268, %v1282
          %v1303 = vmul.f32 %v1269, %v1282
          %v1304 = vmul.f32 %v1270, %v1284
          %v1305 = vmul.f32 %v1271, %v1284
          %v1306 = vmul.f32 %v1272, %v1286
          %v1307 = vmul.f32 %v1273, %v1286
          %v1308 = vmul.f32 %v1274, %v1288
          %v1309 = vmul.f32 %v1275, %v1288
          %v1310 = vmul.f32 %v1276, %v1290
          %v1311 = vmul.f32 %v1277, %v1290
          %v1312 = vmul.f32 %v1278, %v1292
          %v1313 = vmul.f32 %v1279, %v1292
          %v1328 = vrot.slane %v1300, 6
          %v1329 = vrot.slane %v1302, 6
          %v1330 = vsel %vm891, %v1328, %v1329
          %v1331 = vrot.slane %v1301, 6
          %v1332 = vrot.slane %v1303, 6
          %v1333 = vsel %vm891, %v1331, %v1332
          %v1334 = vrot.slane %v1304, 6
          %v1335 = vsel %vm891, %v1329, %v1334
          %v1336 = vrot.slane %v1305, 6
          %v1337 = vsel %vm891, %v1332, %v1336
          %v1338 = vrot.slane %v1306, 6
          %v1339 = vsel %vm891, %v1334, %v1338
          %v1340 = vrot.slane %v1307, 6
          %v1341 = vsel %vm891, %v1336, %v1340
          %v1342 = vrot.slane %v1308, 6
          %v1343 = vsel %vm891, %v1338, %v1342
          %v1344 = vrot.slane %v1309, 6
          %v1345 = vsel %vm891, %v1340, %v1344
          %v1346 = vrot.slane %v1310, 6
          %v1347 = vsel %vm891, %v1342, %v1346
          %v1348 = vrot.slane %v1311, 6
          %v1349 = vsel %vm891, %v1344, %v1348
          %v1350 = vrot.slane %v1312, 6
          %v1351 = vsel %vm891, %v1346, %v1350
          %v1352 = vrot.slane %v1313, 6
          %v1353 = vsel %vm891, %v1348, %v1352
          %s1368 = scalar_lea.vmem [#allocation3], 672
          %1369 = vst [vmem:[%s1368] sm:$0xff] %v1330
          %1370 = vst [vmem:[%s1368 + $0x8] sm:$0xff] %v1333
          %1371 = vst [vmem:[%s1368 + $0x10] sm:$0xff] %v1335
          %1372 = vst [vmem:[%s1368 + $0x18] sm:$0xff] %v1337
          %1373 = vst [vmem:[%s1368 + $0x20] sm:$0xff] %v1339
          %1374 = vst [vmem:[%s1368 + $0x28] sm:$0xff] %v1341
          %1375 = vst [vmem:[%s1368 + $0x30] sm:$0xff] %v1343
          %1376 = vst [vmem:[%s1368 + $0x38] sm:$0xff] %v1345
          %1377 = vst [vmem:[%s1368 + $0x40] sm:$0xff] %v1347
          %1378 = vst [vmem:[%s1368 + $0x48] sm:$0xff] %v1349
          %1379 = vst [vmem:[%s1368 + $0x50] sm:$0xff] %v1351
          %1380 = vst [vmem:[%s1368 + $0x58] sm:$0xff] %v1353
          %1381 = vst [vmem:[%s1368 + $0x60] sm:$0x1] %v1350
          %1382 = vst [vmem:[%s1368 + $0x68] sm:$0x1] %v1352
          %v1383 = vld [vmem:[#allocation2 + $0x10] sm:$0x80]
          %v1384 = vld [vmem:[#allocation2 + $0x18] sm:$0x80]
          %v1385 = vld [vmem:[#allocation2 + $0x20] sm:$0xff]
          %v1386 = vld [vmem:[#allocation2 + $0x28] sm:$0xff]
          %v1387 = vld [vmem:[#allocation2 + $0x30] sm:$0xff]
          %v1388 = vld [vmem:[#allocation2 + $0x38] sm:$0xff]
          %v1389 = vld [vmem:[#allocation2 + $0x40] sm:$0xff]
          %v1390 = vld [vmem:[#allocation2 + $0x48] sm:$0xff]
          %v1391 = vld [vmem:[#allocation2 + $0x50] sm:$0xff]
          %v1392 = vld [vmem:[#allocation2 + $0x58] sm:$0xff]
          %v1393 = vld [vmem:[#allocation2 + $0x60] sm:$0xff]
          %v1394 = vld [vmem:[#allocation2 + $0x68] sm:$0xff]
          %v1395 = vld [vmem:[#allocation2 + $0x70] sm:$0xff]
          %v1396 = vld [vmem:[#allocation2 + $0x78] sm:$0xff]
          %v1411 = vrot.slane %v1383, 7
          %v1412 = vrot.slane %v1385, 7
          %v1413 = vsel %vm372, %v1411, %v1412
          %v1414 = vrot.slane %v1384, 7
          %v1415 = vrot.slane %v1386, 7
          %v1416 = vsel %vm372, %v1414, %v1415
          %v1417 = vrot.slane %v1387, 7
          %v1418 = vsel %vm372, %v1412, %v1417
          %v1419 = vrot.slane %v1388, 7
          %v1420 = vsel %vm372, %v1415, %v1419
          %v1421 = vrot.slane %v1389, 7
          %v1422 = vsel %vm372, %v1417, %v1421
          %v1423 = vrot.slane %v1390, 7
          %v1424 = vsel %vm372, %v1419, %v1423
          %v1425 = vrot.slane %v1391, 7
          %v1426 = vsel %vm372, %v1421, %v1425
          %v1427 = vrot.slane %v1392, 7
          %v1428 = vsel %vm372, %v1423, %v1427
          %v1429 = vrot.slane %v1393, 7
          %v1430 = vsel %vm372, %v1425, %v1429
          %v1431 = vrot.slane %v1394, 7
          %v1432 = vsel %vm372, %v1427, %v1431
          %v1433 = vrot.slane %v1395, 7
          %v1434 = vsel %vm372, %v1429, %v1433
          %v1435 = vrot.slane %v1396, 7
          %v1436 = vsel %vm372, %v1431, %v1435
          %s1451 = scalar_lea.vmem [#allocation3], 784
          %1452 = vst [vmem:[%s1451] sm:$0xff] %v1413
          %1453 = vst [vmem:[%s1451 + $0x8] sm:$0xff] %v1416
          %1454 = vst [vmem:[%s1451 + $0x10] sm:$0xff] %v1418
          %1455 = vst [vmem:[%s1451 + $0x18] sm:$0xff] %v1420
          %1456 = vst [vmem:[%s1451 + $0x20] sm:$0xff] %v1422
          %1457 = vst [vmem:[%s1451 + $0x28] sm:$0xff] %v1424
          %1458 = vst [vmem:[%s1451 + $0x30] sm:$0xff] %v1426
          %1459 = vst [vmem:[%s1451 + $0x38] sm:$0xff] %v1428
          %1460 = vst [vmem:[%s1451 + $0x40] sm:$0xff] %v1430
          %1461 = vst [vmem:[%s1451 + $0x48] sm:$0xff] %v1432
          %1462 = vst [vmem:[%s1451 + $0x50] sm:$0xff] %v1434
          %1463 = vst [vmem:[%s1451 + $0x58] sm:$0xff] %v1436
          %1464 = vst [vmem:[%s1451 + $0x60] sm:$0x1] %v1433
          %1465 = vst [vmem:[%s1451 + $0x68] sm:$0x1] %v1435
          %v1466 = vld [vmem:[#allocation2 + $0x20] sm:$0xff]
          %v1467 = vld [vmem:[#allocation2 + $0x28] sm:$0xff]
          %v1468 = vld [vmem:[#allocation2 + $0x30] sm:$0xff]
          %v1469 = vld [vmem:[#allocation2 + $0x38] sm:$0xff]
          %v1470 = vld [vmem:[#allocation2 + $0x40] sm:$0xff]
          %v1471 = vld [vmem:[#allocation2 + $0x48] sm:$0xff]
          %v1472 = vld [vmem:[#allocation2 + $0x50] sm:$0xff]
          %v1473 = vld [vmem:[#allocation2 + $0x58] sm:$0xff]
          %v1474 = vld [vmem:[#allocation2 + $0x60] sm:$0xff]
          %v1475 = vld [vmem:[#allocation2 + $0x68] sm:$0xff]
          %v1476 = vld [vmem:[#allocation2 + $0x70] sm:$0xff]
          %v1477 = vld [vmem:[#allocation2 + $0x78] sm:$0xff]
          %v1478 = vld [vmem:[#allocation2 + $0x80] sm:$0x1]
          %v1479 = vld [vmem:[#allocation2 + $0x88] sm:$0x1]
          %v1480 = vmul.f32 %v1466, %v737
          %v1481 = vmul.f32 %v1467, %v737
          %v1482 = vmul.f32 %v1468, %v738
          %v1483 = vmul.f32 %v1469, %v738
          %v1484 = vmul.f32 %v1470, %v739
          %v1485 = vmul.f32 %v1471, %v739
          %v1486 = vmul.f32 %v1472, %v740
          %v1487 = vmul.f32 %v1473, %v740
          %v1488 = vmul.f32 %v1474, %v741
          %v1489 = vmul.f32 %v1475, %v741
          %v1490 = vmul.f32 %v1476, %v742
          %v1491 = vmul.f32 %v1477, %v742
          %v1492 = vmul.f32 %v1478, %v743
          %v1493 = vmul.f32 %v1479, %v743
          %s1494 = scalar_lea.vmem [#allocation3], 896
          %1495 = vst [vmem:[%s1494] sm:$0xff] %v1480
          %1496 = vst [vmem:[%s1494 + $0x8] sm:$0xff] %v1481
          %1497 = vst [vmem:[%s1494 + $0x10] sm:$0xff] %v1482
          %1498 = vst [vmem:[%s1494 + $0x18] sm:$0xff] %v1483
          %1499 = vst [vmem:[%s1494 + $0x20] sm:$0xff] %v1484
          %1500 = vst [vmem:[%s1494 + $0x28] sm:$0xff] %v1485
          %1501 = vst [vmem:[%s1494 + $0x30] sm:$0xff] %v1486
          %1502 = vst [vmem:[%s1494 + $0x38] sm:$0xff] %v1487
          %1503 = vst [vmem:[%s1494 + $0x40] sm:$0xff] %v1488
          %1504 = vst [vmem:[%s1494 + $0x48] sm:$0xff] %v1489
          %1505 = vst [vmem:[%s1494 + $0x50] sm:$0xff] %v1490
          %1506 = vst [vmem:[%s1494 + $0x58] sm:$0xff] %v1491
          %1507 = vst [vmem:[%s1494 + $0x60] sm:$0x1] %v1492
          %1508 = vst [vmem:[%s1494 + $0x68] sm:$0x1] %v1493
          %1509 = vst [vmem:[%s344] sm:$0xff] 0.0
          %1510 = vst [vmem:[%s344 + $0x8] sm:$0xff] 0.0
          %1511 = vst [vmem:[%s344 + $0x10] sm:$0xff] 0.0
          %1512 = vst [vmem:[%s344 + $0x18] sm:$0xff] 0.0
          %1513 = vst [vmem:[%s344 + $0x20] sm:$0xff] 0.0
          %1514 = vst [vmem:[%s344 + $0x28] sm:$0xff] 0.0
          %1515 = vst [vmem:[%s344 + $0x30] sm:$0xff] 0.0
          %1516 = vst [vmem:[%s344 + $0x38] sm:$0xff] 0.0
          %1517 = vst [vmem:[%s344 + $0x40] sm:$0xff] 0.0
          %1518 = vst [vmem:[%s344 + $0x48] sm:$0xff] 0.0
          %1519 = vst [vmem:[%s344 + $0x50] sm:$0xff] 0.0
          %1520 = vst [vmem:[%s344 + $0x58] sm:$0xff] 0.0
          %1521 = vst [vmem:[%s344 + $0x60] sm:$0x1] 0.0
          %1522 = vst [vmem:[%s344 + $0x68] sm:$0x1] 0.0
        $region56: #{tpu_custom_call.1} parent=35 // pred_fallthru
          _
        %v1523 = vld [vmem:[%s344] sm:$0xff]
        %v1524 = vld [vmem:[%s344 + $0x8] sm:$0xff]
        %v1525 = vld [vmem:[%s344 + $0x10] sm:$0xff]
        %v1526 = vld [vmem:[%s344 + $0x18] sm:$0xff]
        %v1527 = vld [vmem:[%s344 + $0x20] sm:$0xff]
        %v1528 = vld [vmem:[%s344 + $0x28] sm:$0xff]
        %v1529 = vld [vmem:[%s344 + $0x30] sm:$0xff]
        %v1530 = vld [vmem:[%s344 + $0x38] sm:$0xff]
        %v1531 = vld [vmem:[%s344 + $0x40] sm:$0xff]
        %v1532 = vld [vmem:[%s344 + $0x48] sm:$0xff]
        %v1533 = vld [vmem:[%s344 + $0x50] sm:$0xff]
        %v1534 = vld [vmem:[%s344 + $0x58] sm:$0xff]
        %v1535 = vld [vmem:[%s344 + $0x60] sm:$0x1]
        %v1536 = vld [vmem:[%s344 + $0x68] sm:$0x1]
        %s1537 = smul.u32 %s32, 14
        %s1538 = smul.addr %s1537, 8
        %s1539 = scalar_lea.vmem [#allocation3], %s1538
        %v1540 = vld [vmem:[%s1539] sm:$0xff]
        %v1541 = vld [vmem:[%s1539 + $0x8] sm:$0xff]
        %v1542 = vld [vmem:[%s1539 + $0x10] sm:$0xff]
        %v1543 = vld [vmem:[%s1539 + $0x18] sm:$0xff]
        %v1544 = vld [vmem:[%s1539 + $0x20] sm:$0xff]
        %v1545 = vld [vmem:[%s1539 + $0x28] sm:$0xff]
        %v1546 = vld [vmem:[%s1539 + $0x30] sm:$0xff]
        %v1547 = vld [vmem:[%s1539 + $0x38] sm:$0xff]
        %v1548 = vld [vmem:[%s1539 + $0x40] sm:$0xff]
        %v1549 = vld [vmem:[%s1539 + $0x48] sm:$0xff]
        %v1550 = vld [vmem:[%s1539 + $0x50] sm:$0xff]
        %v1551 = vld [vmem:[%s1539 + $0x58] sm:$0xff]
        %v1552 = vld [vmem:[%s1539 + $0x60] sm:$0x1]
        %v1553 = vld [vmem:[%s1539 + $0x68] sm:$0x1]
        %v1554 = vld [vmem:[%s287] sm:$0xff]
        %v1555 = vld [vmem:[%s287 + $0x8] sm:$0xff]
        %v1556 = vld [vmem:[%s287 + $0x10] sm:$0xff]
        %v1557 = vld [vmem:[%s287 + $0x18] sm:$0xff]
        %v1558 = vld [vmem:[%s287 + $0x20] sm:$0xff]
        %v1559 = vld [vmem:[%s287 + $0x28] sm:$0xff]
        %v1560 = vld [vmem:[%s287 + $0x30] sm:$0xff]
        %v1561 = vld [vmem:[%s287 + $0x38] sm:$0xff]
        %v1562 = vld [vmem:[%s287 + $0x40] sm:$0xff]
        %v1563 = vld [vmem:[%s287 + $0x48] sm:$0xff]
        %v1564 = vld [vmem:[%s287 + $0x50] sm:$0xff]
        %v1565 = vld [vmem:[%s287 + $0x58] sm:$0xff]
        %v1566 = vld [vmem:[%s287 + $0x60] sm:$0xff]
        %v1567 = vld [vmem:[%s287 + $0x68] sm:$0xff]
        %v1568 = vld [vmem:[%s287 + $0x70] sm:$0xff]
        %v1569 = vld [vmem:[%s287 + $0x78] sm:$0xff]
        %v1570 = vld [vmem:[%s287 + $0x80] sm:$0xff]
        %v1571 = vld [vmem:[%s287 + $0x88] sm:$0xff]
        %v1572 = vld [vmem:[%s287 + $0x90] sm:$0xff]
        %v1573 = vld [vmem:[%s287 + $0x98] sm:$0xff]
        %v1574 = vld [vmem:[%s287 + $0xa0] sm:$0xff]
        %v1575 = vld [vmem:[%s287 + $0xa8] sm:$0xff]
        %v1576 = vld [vmem:[%s287 + $0xb0] sm:$0xff]
        %v1577 = vld [vmem:[%s287 + $0xb8] sm:$0xff]
        %v1578 = vld [vmem:[%s287 + $0xc0] sm:$0xff]
        %v1579 = vld [vmem:[%s287 + $0xc8] sm:$0xff]
        %v1580 = vld [vmem:[%s287 + $0xd0] sm:$0xff]
        %v1581 = vld [vmem:[%s287 + $0xd8] sm:$0xff]
        %v1582 = vld [vmem:[%s287 + $0xe0] sm:$0xff]
        %v1583 = vld [vmem:[%s287 + $0xe8] sm:$0xff]
        %v1584 = vld [vmem:[%s287 + $0xf0] sm:$0xff]
        %v1585 = vld [vmem:[%s287 + $0xf8] sm:$0xff]
        %v1586 = vld [vmem:[%s287 + $0x100] sm:$0xff]
        %v1587 = vld [vmem:[%s287 + $0x108] sm:$0xff]
        %v1588 = vld [vmem:[%s287 + $0x110] sm:$0xff]
        %v1589 = vld [vmem:[%s287 + $0x118] sm:$0xff]
        %v1590 = vld [vmem:[%s287 + $0x120] sm:$0xff]
        %v1591 = vld [vmem:[%s287 + $0x128] sm:$0xff]
        %v1592 = vld [vmem:[%s287 + $0x130] sm:$0xff]
        %v1593 = vld [vmem:[%s287 + $0x138] sm:$0xff]
        %v1594 = vld [vmem:[%s287 + $0x140] sm:$0xff]
        %v1595 = vld [vmem:[%s287 + $0x148] sm:$0xff]
        %v1596 = vld [vmem:[%s287 + $0x150] sm:$0xff]
        %v1597 = vld [vmem:[%s287 + $0x158] sm:$0xff]
        %v1598 = vld [vmem:[%s287 + $0x160] sm:$0xff]
        %v1599 = vld [vmem:[%s287 + $0x168] sm:$0xff]
        %v1600 = vld [vmem:[%s287 + $0x170] sm:$0xff]
        %v1601 = vld [vmem:[%s287 + $0x178] sm:$0xff]
        %v1602 = vld [vmem:[%s287 + $0x180] sm:$0xff]
        %v1603 = vld [vmem:[%s287 + $0x188] sm:$0xff]
        %v1604 = vld [vmem:[%s287 + $0x190] sm:$0xff]
        %v1605 = vld [vmem:[%s287 + $0x198] sm:$0xff]
        %v1606 = vld [vmem:[%s287 + $0x1a0] sm:$0xff]
        %v1607 = vld [vmem:[%s287 + $0x1a8] sm:$0xff]
        %v1608 = vld [vmem:[%s287 + $0x1b0] sm:$0xff]
        %v1609 = vld [vmem:[%s287 + $0x1b8] sm:$0xff]
        %v1610 = vld [vmem:[%s287 + $0x1c0] sm:$0xff]
        %v1611 = vld [vmem:[%s287 + $0x1c8] sm:$0xff]
        %v1612 = vld [vmem:[%s287 + $0x1d0] sm:$0xff]
        %v1613 = vld [vmem:[%s287 + $0x1d8] sm:$0xff]
        %v1614 = vld [vmem:[%s287 + $0x1e0] sm:$0xff]
        %v1615 = vld [vmem:[%s287 + $0x1e8] sm:$0xff]
        %v1616 = vld [vmem:[%s287 + $0x1f0] sm:$0xff]
        %v1617 = vld [vmem:[%s287 + $0x1f8] sm:$0xff]
        %1618 = vmatprep.subr.mxu0 %v1555
        %1619 = vmatpush1.msra.mxu0 %v1554
        %1620 = vmatprep.subr.mxu0 %v1557
        %1621 = vmatpush1.msra.mxu0 %v1556
        %1622 = vmatprep.subr.mxu0 %v1559
        %1623 = vmatpush1.msra.mxu0 %v1558
        %1624 = vmatprep.subr.mxu0 %v1561
        %1625 = vmatpush1.msra.mxu0 %v1560
        %1626 = vmatprep.subr.mxu0 %v1563
        %1627 = vmatpush1.msra.mxu0 %v1562
        %1628 = vmatprep.subr.mxu0 %v1565
        %1629 = vmatpush1.msra.mxu0 %v1564
        %1630 = vmatprep.subr.mxu0 %v1567
        %1631 = vmatpush1.msra.mxu0 %v1566
        %1632 = vmatprep.subr.mxu0 %v1569
        %1633 = vmatpush1.msra.mxu0 %v1568
        %1634 = vmatprep.subr.mxu0 %v1571
        %1635 = vmatpush1.msra.mxu0 %v1570
        %1636 = vmatprep.subr.mxu0 %v1573
        %1637 = vmatpush1.msra.mxu0 %v1572
        %1638 = vmatprep.subr.mxu0 %v1575
        %1639 = vmatpush1.msra.mxu0 %v1574
        %1640 = vmatprep.subr.mxu0 %v1577
        %1641 = vmatpush1.msra.mxu0 %v1576
        %1642 = vmatprep.subr.mxu0 %v1579
        %1643 = vmatpush1.msra.mxu0 %v1578
        %1644 = vmatprep.subr.mxu0 %v1581
        %1645 = vmatpush1.msra.mxu0 %v1580
        %1646 = vmatprep.subr.mxu0 %v1583
        %1647 = vmatpush1.msra.mxu0 %v1582
        %1648 = vmatprep.subr.mxu0 %v1585
        %1649 = vmatpush1.msra.mxu0 %v1584
        %1650 = vmatprep.subr.mxu0 %v1587
        %1651 = vmatpush1.msra.mxu0 %v1586
        %1652 = vmatprep.subr.mxu0 %v1589
        %1653 = vmatpush1.msra.mxu0 %v1588
        %1654 = vmatprep.subr.mxu0 %v1591
        %1655 = vmatpush1.msra.mxu0 %v1590
        %1656 = vmatprep.subr.mxu0 %v1593
        %1657 = vmatpush1.msra.mxu0 %v1592
        %1658 = vmatprep.subr.mxu0 %v1595
        %1659 = vmatpush1.msra.mxu0 %v1594
        %1660 = vmatprep.subr.mxu0 %v1597
        %1661 = vmatpush1.msra.mxu0 %v1596
        %1662 = vmatprep.subr.mxu0 %v1599
        %1663 = vmatpush1.msra.mxu0 %v1598
        %1664 = vmatprep.subr.mxu0 %v1601
        %1665 = vmatpush1.msra.mxu0 %v1600
        %1666 = vmatprep.subr.mxu0 %v1603
        %1667 = vmatpush1.msra.mxu0 %v1602
        %1668 = vmatprep.subr.mxu0 %v1605
        %1669 = vmatpush1.msra.mxu0 %v1604
        %1670 = vmatprep.subr.mxu0 %v1607
        %1671 = vmatpush1.msra.mxu0 %v1606
        %1672 = vmatprep.subr.mxu0 %v1609
        %1673 = vmatpush1.msra.mxu0 %v1608
        %1674 = vmatprep.subr.mxu0 %v1611
        %1675 = vmatpush1.msra.mxu0 %v1610
        %1676 = vmatprep.subr.mxu0 %v1613
        %1677 = vmatpush1.msra.mxu0 %v1612
        %1678 = vmatprep.subr.mxu0 %v1615
        %1679 = vmatpush1.msra.mxu0 %v1614
        %1680 = vmatprep.subr.mxu0 %v1617
        %1681 = vmatpush1.msra.mxu0 %v1616
        %1682 = vmatprep.mubr.f32.mxu0 %v1541
        %1683 = vmatmul.mubr.f32.gmra.mrb[0].mxu0 %v1540
        %v1684 = vpop.f32.mrb[0].mxu0
        %v1685 = vadd.f32 0.0, %v1684
        %v1686 = vpop.f32.mrb[0].mxu0
        %v1687 = vadd.f32 0.0, %v1686
        %1688 = vmatprep.mubr.f32.mxu0 %v1543
        %1689 = vmatmul.mubr.f32.gmra.mrb[0].mxu0 %v1542
        %v1690 = vpop.f32.mrb[0].mxu0
        %v1691 = vadd.f32 0.0, %v1690
        %v1692 = vpop.f32.mrb[0].mxu0
        %v1693 = vadd.f32 0.0, %v1692
        %1694 = vmatprep.mubr.f32.mxu0 %v1545
        %1695 = vmatmul.mubr.f32.gmra.mrb[0].mxu0 %v1544
        %v1696 = vpop.f32.mrb[0].mxu0
        %v1697 = vadd.f32 0.0, %v1696
        %v1698 = vpop.f32.mrb[0].mxu0
        %v1699 = vadd.f32 0.0, %v1698
        %1700 = vmatprep.mubr.f32.mxu0 %v1547
        %1701 = vmatmul.mubr.f32.gmra.mrb[0].mxu0 %v1546
        %v1702 = vpop.f32.mrb[0].mxu0
        %v1703 = vadd.f32 0.0, %v1702
        %v1704 = vpop.f32.mrb[0].mxu0
        %v1705 = vadd.f32 0.0, %v1704
        %1706 = vmatprep.mubr.f32.mxu0 %v1549
        %1707 = vmatmul.mubr.f32.gmra.mrb[0].mxu0 %v1548
        %v1708 = vpop.f32.mrb[0].mxu0
        %v1709 = vadd.f32 0.0, %v1708
        %v1710 = vpop.f32.mrb[0].mxu0
        %v1711 = vadd.f32 0.0, %v1710
        %1712 = vmatprep.mubr.f32.mxu0 %v1551
        %1713 = vmatmul.mubr.f32.gmra.mrb[0].mxu0 %v1550
        %v1714 = vpop.f32.mrb[0].mxu0
        %v1715 = vadd.f32 0.0, %v1714
        %v1716 = vpop.f32.mrb[0].mxu0
        %v1717 = vadd.f32 0.0, %v1716
        %1718 = vmatprep.mubr.f32.mxu0 %v1553
        %1719 = vmatmul.mubr.f32.gmra.mrb[0].mxu0 %v1552
        %v1720 = vpop.f32.mrb[0].mxu0
        %v1721 = vadd.f32 0.0, %v1720
        %v1722 = vpop.f32.mrb[0].mxu0
        %v1723 = vadd.f32 0.0, %v1722
        %1724 = vdwg.mxu0
        %v1725 = vadd.f32 %v1523, %v1685
        %v1726 = vadd.f32 %v1524, %v1687
        %v1727 = vadd.f32 %v1525, %v1691
        %v1728 = vadd.f32 %v1526, %v1693
        %v1729 = vadd.f32 %v1527, %v1697
        %v1730 = vadd.f32 %v1528, %v1699
        %v1731 = vadd.f32 %v1529, %v1703
        %v1732 = vadd.f32 %v1530, %v1705
        %v1733 = vadd.f32 %v1531, %v1709
        %v1734 = vadd.f32 %v1532, %v1711
        %v1735 = vadd.f32 %v1533, %v1715
        %v1736 = vadd.f32 %v1534, %v1717
        %v1737 = vadd.f32 %v1535, %v1721
        %v1738 = vadd.f32 %v1536, %v1723
        %1739 = vst [vmem:[%s344] sm:$0xff] %v1725
        %1740 = vst [vmem:[%s344 + $0x8] sm:$0xff] %v1726
        %1741 = vst [vmem:[%s344 + $0x10] sm:$0xff] %v1727
        %1742 = vst [vmem:[%s344 + $0x18] sm:$0xff] %v1728
        %1743 = vst [vmem:[%s344 + $0x20] sm:$0xff] %v1729
        %1744 = vst [vmem:[%s344 + $0x28] sm:$0xff] %v1730
        %1745 = vst [vmem:[%s344 + $0x30] sm:$0xff] %v1731
        %1746 = vst [vmem:[%s344 + $0x38] sm:$0xff] %v1732
        %1747 = vst [vmem:[%s344 + $0x40] sm:$0xff] %v1733
        %1748 = vst [vmem:[%s344 + $0x48] sm:$0xff] %v1734
        %1749 = vst [vmem:[%s344 + $0x50] sm:$0xff] %v1735
        %1750 = vst [vmem:[%s344 + $0x58] sm:$0xff] %v1736
        %1751 = vst [vmem:[%s344 + $0x60] sm:$0x1] %v1737
        %1752 = vst [vmem:[%s344 + $0x68] sm:$0x1] %v1738
        %s1753 = sand.u32 %s153, 1
        %s1754 = scalar_lea.sflag [#allocation6], %s1753
        %s1755 = sand.u32 %s153, 1
        %s1756 = smul.addr %s1755, 112
        %s1757 = scalar_lea.vmem [#allocation12], %s1756
        // Predicated region
        $region57: #{tpu_custom_call.1} parent=35 // pred_check
          %p1758 = pneg %p163
        $region58: #{tpu_custom_call.1} parent=35 // pred_check_branch
          %1760 = sbr.rel (%p1758) target = $region60
        $region59: #{tpu_custom_call.1} parent=35 // pred_region
          %s1761 = smul.u32 2, %s31
          %s1763 = ssub.s32 1792, 1792
          %1764 = vsyncadd %s1754, %s1763
          %s1765 = smul.addr %s1761, 128
          %s1766 = scalar_lea.hbm %s4, %s1765
          %s1767 = sshll.u32 %s1757, 4
          %s1768 = int_to_ptr.vmem [resolvable:$true] %s1767
          %1773 = dma.vmem_to_hbm [thread:$0]  %s1768, 1792, %s1766, %s1754, 256, 512, 16
        $region60: #{tpu_custom_call.1} parent=35 // pred_fallthru
          _
      $region36: #{tpu_custom_call.1} parent=5 // pred_fallthru
        _
      %p1774 = scmp.le.s32.totalorder 2, %s22
      // Predicated region
      $region61: #{tpu_custom_call.1} parent=5 // pred_check
        %p1775 = pneg %p1774
      $region62: #{tpu_custom_call.1} parent=5 // pred_check_branch
        %1777 = sbr.rel (%p1775) target = $region64
      $region63: #{tpu_custom_call.1} parent=5 // pred_region
        %s1778 = ssub.s32 %s22, 2
        // Predicated region
        $region65: #{tpu_custom_call.1} parent=63 // pred_check
          %p1779 = pneg %p169
        $region66: #{tpu_custom_call.1} parent=63 // pred_check_branch
          %1781 = sbr.rel (%p1779) target = $region68
        $region67: #{tpu_custom_call.1} parent=63 // pred_region
          %s1782 = sand.u32 %s154, 1
          %s1783 = scalar_lea.sflag [#allocation6], %s1782
          %s1784 = sand.u32 %s154, 1
          %s1785 = smul.addr %s1784, 112
          %s1786 = scalar_lea.vmem [#allocation12], %s1785
          %1787 = dma.done %s1783, 1792
        $region68: #{tpu_custom_call.1} parent=63 // pred_fallthru
          _
      $region64: #{tpu_custom_call.1} parent=5 // pred_fallthru
        _
    $region6: #{tpu_custom_call.1} parent=1 // loop_footer
      %s26 = sadd.s32 1, %s22
    $region7: #{tpu_custom_call.1} parent=1 // loop_footer_branch
      %21 = sbr.rel target = $region3
    $region8: #{tpu_custom_call.1} parent=1 // loop_exit
      _
    %1788 = vsyncpa [#allocation5], 1
    %s1789 = scalar_lea.sflag [#allocation5], 1
    %1790 = vsyncpa %s1789, 1
    %1791 = vsyncpa [#allocation8], 1
    %s1792 = scalar_lea.sflag [#allocation8], 1
    %1793 = vsyncpa %s1792, 1
    %1794 = vsyncpa [#allocation11], 1
    %s1795 = scalar_lea.sflag [#allocation11], 1
    %1796 = vsyncpa %s1795, 1
    %1797 = vsyncpa [#allocation6], 1
    %s1798 = scalar_lea.sflag [#allocation6], 1
    %1799 = vsyncpa %s1798, 1

</llo_original>
